<compile_context>
chip_gen: v6e
topology: v6e:2x2x1
jax: 0.10.0
libtpu: 0.0.40
codegen_flags: <defaults>
</compile_context>

<pallas_src>
import functools

import jax
import jax.numpy as jnp
import numpy as np
from jax import lax
from jax.experimental import pallas as pl
from jax.experimental.pallas import tpu as pltpu

EPS = 1e-5
LANE = 128


def _round_up(x, m):
    return (x + m - 1) // m * m


# ---------------------------------------------------------------------------
# Hardware-derived budgets / feature probes
# ---------------------------------------------------------------------------

def _vmem_limit_bytes():
    """Scoped-VMEM limit derived from the physical VMEM of the local chip."""
    try:
        cap = int(pltpu.get_tpu_info().vmem_capacity_bytes)
    except Exception:                      # unknown chip / API mismatch
        cap = 64 * 1024 * 1024             # assume v7x-sized VMEM (conservative)
    return min((cap * 3) // 4, 96 * 1024 * 1024)


_SINGLE_BUFFER_OK = None


def _single_buffer_ok():
    """Probe whether BlockSpec(pipeline_mode=pl.Buffered(1)) lowers here."""
    global _SINGLE_BUFFER_OK
    if _SINGLE_BUFFER_OK is None:
        def k(x_ref, o_ref):
            o_ref[...] = x_ref[...] + 1.0
        try:
            out = pl.pallas_call(
                k,
                grid=(2,),
                in_specs=[pl.BlockSpec((8, LANE), lambda i: (0, 0),
                                       pipeline_mode=pl.Buffered(1))],
                out_specs=pl.BlockSpec((8, LANE), lambda i: (0, 0)),
                out_shape=jax.ShapeDtypeStruct((8, LANE), jnp.float32),
            )(jnp.zeros((8, LANE), jnp.float32))
            jax.block_until_ready(out)
            _SINGLE_BUFFER_OK = True
        except Exception:
            _SINGLE_BUFFER_OK = False
    return _SINGLE_BUFFER_OK


def _resident_spec(shape):
    """Spec for a block identical at every grid step (weights, BN scale/shift):
    constant index_map, single-buffered when supported (VMEM savings, esp. v7x)."""
    nd = len(shape)
    idx = lambda n: (0,) * nd
    if _single_buffer_ok():
        return pl.BlockSpec(shape, idx, pipeline_mode=pl.Buffered(1))
    return pl.BlockSpec(shape, idx)


# ---------------------------------------------------------------------------
# Kernels
# ---------------------------------------------------------------------------

def _conv1_kernel(taps, sc_tap, Ho, Wo, project, packed, xph_ref, w1_ref, *rest):
    """conv1 (3x3, stride folded into the phase decomposition) for B images,
    fused with the optional 1x1 projection shortcut and per-channel
    (sum, sum_sq) partials for BatchNorm.

    packed=True : taps concatenated along K -> one (M, 9*Cin) x (9*Cin, Cop)
                  MXU matmul (small-Cin path).
    packed=False: 9 shifted matmuls accumulated in an f32 VMEM scratch.
    """
    rest = list(rest)
    acc_ref = None if packed else rest.pop()            # scratch ref comes last
    if project:
        wsc_ref = rest.pop(0)
        y1_ref, st1_ref, ysc_ref, stsc_ref = rest
    else:
        y1_ref, st1_ref = rest

    B = xph_ref.shape[1]
    cs = xph_ref.shape[-1]
    cop = w1_ref.shape[-1]
    M = B * Ho * Wo

    if packed:
        wins = [xph_ref[p, :, ry:ry + Ho, rx:rx + Wo, :] for (p, ry, rx) in taps]
        lhs = jnp.concatenate(wins, axis=-1).reshape(M, len(taps) * cs)
        acc = jnp.dot(lhs, w1_ref[...], preferred_element_type=jnp.float32)
    else:
        for t, (p, ry, rx) in enumerate(taps):
            win = xph_ref[p, :, ry:ry + Ho, rx:rx + Wo, :].reshape(M, cs)
            d = jnp.dot(win, w1_ref[t], preferred_element_type=jnp.float32)
            if t == 0:
                acc_ref[...] = d
            else:
                acc_ref[...] += d
        acc = acc_ref[...]

    y1_ref[...] = acc.reshape(B, Ho, Wo, cop).astype(y1_ref.dtype)
    st1_ref[0, 0:1, :] = jnp.sum(acc, axis=0, keepdims=True)
    st1_ref[0, 1:2, :] = jnp.sum(acc * acc, axis=0, keepdims=True)

    if project:
        p, ry, rx = sc_tap
        xs = xph_ref[p, :, ry:ry + Ho, rx:rx + Wo, :].reshape(M, cs)
        accs = jnp.dot(xs, wsc_ref[...], preferred_element_type=jnp.float32)
        ysc_ref[...] = accs.reshape(B, Ho, Wo, cop).astype(ysc_ref.dtype)
        stsc_ref[0, 0:1, :] = jnp.sum(accs, axis=0, keepdims=True)
        stsc_ref[0, 1:2, :] = jnp.sum(accs * accs, axis=0, keepdims=True)


def _conv2_kernel(Ho, Wo, packed, y1_ref, s1_ref, b1_ref, w2_ref,
                  y2_ref, st2_ref, zbuf_ref, *maybe_acc):
    """bn1 (pre-folded per-channel affine) + ReLU fused into conv2 (3x3, s=1)."""
    B = y1_ref.shape[0]
    cop = w2_ref.shape[-1]
    cs2 = zbuf_ref.shape[-1]
    M = B * Ho * Wo

    # BN1 affine + ReLU on the f32 VPU.
    z = jnp.maximum(y1_ref[...].astype(jnp.float32) * s1_ref[...] + b1_ref[...],
                    0.0)

    # Zero-padded activation slab in VMEM scratch.  Only the 1-pixel halo is
    # zeroed; redone each step so no cross-step scratch state is assumed
    # (safe under "parallel" grid sharding across TensorCores).
    zrow = jnp.zeros((B, 1, Wo + 2, cs2), zbuf_ref.dtype)
    zcol = jnp.zeros((B, Ho + 2, 1, cs2), zbuf_ref.dtype)
    zbuf_ref[:, 0:1, :, :] = zrow
    zbuf_ref[:, Ho + 1:Ho + 2, :, :] = zrow
    zbuf_ref[:, :, 0:1, :] = zcol
    zbuf_ref[:, :, Wo + 1:Wo + 2, :] = zcol
    zbuf_ref[:, 1:Ho + 1, 1:Wo + 1, :] = z[..., :cs2].astype(zbuf_ref.dtype)

    if packed:
        wins = [zbuf_ref[:, dy:dy + Ho, dx:dx + Wo, :]
                for dy in range(3) for dx in range(3)]
        lhs = jnp.concatenate(wins, axis=-1).reshape(M, 9 * cs2)
        acc = jnp.dot(lhs, w2_ref[...], preferred_element_type=jnp.float32)
    else:
        acc_ref = maybe_acc[0]
        for t in range(9):
            dy, dx = t // 3, t % 3
            win = zbuf_ref[:, dy:dy + Ho, dx:dx + Wo, :].reshape(M, cs2)
            d = jnp.dot(win, w2_ref[t], preferred_element_type=jnp.float32)
            if t == 0:
                acc_ref[...] = d
            else:
                acc_ref[...] += d
        acc = acc_ref[...]

    y2_ref[...] = acc.reshape(B, Ho, Wo, cop).astype(y2_ref.dtype)
    st2_ref[0, 0:1, :] = jnp.sum(acc, axis=0, keepdims=True)
    st2_ref[0, 1:2, :] = jnp.sum(acc * acc, axis=0, keepdims=True)


def _finalize_kernel(project, y2_ref, s2_ref, b2_ref, *rest):
    """bn2 + shortcut (bn'd projection or identity) + relu; one fused store."""
    if project:
        ysc_ref, ssc_ref, bsc_ref, o_ref = rest
        sc = ysc_ref[...].astype(jnp.float32) * ssc_ref[...] + bsc_ref[...]
    else:
        xid_ref, o_ref = rest
        sc = xid_ref[...]
    y = y2_ref[...].astype(jnp.float32) * s2_ref[...] + b2_ref[...]
    o_ref[...] = jnp.maximum(y + sc, 0.0).astype(o_ref.dtype)


# ---------------------------------------------------------------------------
# Wrapper-side glue (layout only; all hot math runs in the kernels above)
# ---------------------------------------------------------------------------

def _prep_w3x3_packed(w, cop_p):
    # (Cout, Cin, 3, 3) -> (9*Cin, cop_p) bf16, rows tap-major / channel-minor.
    co, ci = w.shape[0], w.shape[1]
    wt = jnp.transpose(w, (2, 3, 1, 0)).reshape(9 * ci, co)
    return (jnp.zeros((9 * ci, cop_p), jnp.float32)
            .at[:, :co].set(wt).astype(jnp.bfloat16))


def _prep_w3x3_taps(w, cip, cop_p):
    # (Cout, Cin, 3, 3) -> (9, cip, cop_p) bf16, tap t = ky*3 + kx.
    co, ci = w.shape[0], w.shape[1]
    wt = jnp.transpose(w, (2, 3, 1, 0)).reshape(9, ci, co)
    return (jnp.zeros((9, cip, cop_p), jnp.float32)
            .at[:, :ci, :co].set(wt).astype(jnp.bfloat16))


def _prep_w1x1(w, cs, cop_p):
    co, ci = w.shape[0], w.shape[1]
    return (jnp.zeros((cs, cop_p), jnp.float32)
            .at[:ci, :co].set(w.reshape(co, ci).T).astype(jnp.bfloat16))


def _pad_vec(v, cop_p):
    return jnp.zeros((cop_p,), jnp.float32).at[:v.shape[0]].set(v.astype(jnp.float32))


def _bn_affine(partials, gamma, beta, count):
    # partials: (G, 2, Cop) per-grid-step (sum, sum_sq).  Biased batch variance.
    tot = jnp.sum(partials, axis=0)
    mean = tot[0] / count
    var = jnp.maximum(tot[1] / count - mean * mean, 0.0)
    scale = gamma * lax.rsqrt(var + EPS)
    shift = beta - mean * scale
    return scale.reshape(1, -1), shift.reshape(1, -1)


def _estimate_per_image_bytes(P, Hq, Wq, cs1, Ho, Wo, cop, cs2, project,
                              pack1, pack2):
    b16, b32 = 2, 4
    y_blk = Ho * Wo * cop
    p1 = 2 * P * Hq * Wq * cs1 * b16                     # phased input (x2 bufs)
    p1 += 2 * y_blk * b16 * (2 if project else 1)        # y1 (+ysc) out (x2 bufs)
    p1 += y_blk * b32                                    # f32 accumulator value
    p1 += 0 if pack1 else y_blk * b32                    # VMEM acc scratch
    p2 = 2 * y_blk * b16 * 2                             # y1 in + y2 out (x2 bufs)
    p2 += (Ho + 2) * (Wo + 2) * cs2 * b16                # zbuf scratch
    p2 += 2 * y_blk * b32                                # z + acc values
    p2 += 0 if pack2 else y_blk * b32
    p3 = 2 * y_blk * (b16 * (2 if project else 1)
                      + (0 if project else b32) + b32)
    return max(p1, p2, p3)


def _pick_b_tile(N, per_image, fixed, budget):
    best = 1
    for b in range(1, N + 1):
        if N % b:
            continue
        if fixed + b * per_image > budget:
            break
        if N >= 2 and N // b < 2:     # keep >=2 grid steps for megacore sharding
            break
        best = b
    return best


def basic_block_forward(x_nchw, params, stride):
    x = jnp.transpose(x_nchw, (0, 2, 3, 1)).astype(jnp.float32)      # NHWC
    N, H, W, Cin = x.shape
    Cout = params["w1"].shape[0]
    project = (stride != 1) or (Cin != Cout)
    s = stride
    assert s in (1, 2) and H % s == 0 and W % s == 0
    Ho, Wo = H // s, W // s
    Cop = _round_up(Cout, LANE)
    Mtot = N * Ho * Wo

    pack1 = 9 * Cin <= LANE            # tap-packed conv1 (small Cin)
    pack2 = 9 * Cout <= LANE           # tap-packed conv2 (small Cout)
    Cs1 = Cin if pack1 else _round_up(Cin, LANE)
    Cs2 = Cout if pack2 else Cop

    # ---- input prep: one fused pad+cast; phase-split only when strided -----
    x_pad = jnp.pad(x, ((0, 0), (1, 1), (1, 1), (0, Cs1 - Cin))).astype(jnp.bfloat16)
    if s == 1:
        xph = x_pad[None]
    else:
        xph = jnp.stack([x_pad[:, py::s, px::s, :]
                         for py in range(s) for px in range(s)], axis=0)
    P, _, Hq, Wq, _ = xph.shape

    taps = [((dy % s) * s + (dx % s), dy // s, dx // s)
            for dy in range(3) for dx in range(3)]
    sc_tap = ((1 % s) * s + (1 % s), 1 // s, 1 // s)                  # 1x1 tap

    # ---- weights / BN params -------------------------------------------------
    w1m = (_prep_w3x3_packed(params["w1"], Cop) if pack1
           else _prep_w3x3_taps(params["w1"], Cs1, Cop))
    w2m = (_prep_w3x3_packed(params["w2"], Cop) if pack2
           else _prep_w3x3_taps(params["w2"], Cs2, Cop))
    wsc = _prep_w1x1(params["wsc"], Cs1, Cop) if project else None
    g1, b1 = _pad_vec(params["g1"], Cop), _pad_vec(params["b1"], Cop)
    g2, b2 = _pad_vec(params["g2"], Cop), _pad_vec(params["b2"], Cop)

    # ---- VMEM budget, batch tile, compiler params ----------------------------
    vmem_limit = _vmem_limit_bytes()
    w_bytes = int(w1m.size + w2m.size) * 2 + (int(wsc.size) * 2 if project else 0)
    fixed = w_bytes * (1 if _single_buffer_ok() else 2) + 64 * 1024
    per_img = _estimate_per_image_bytes(P, Hq, Wq, Cs1, Ho, Wo, Cop, Cs2,
                                        project, pack1, pack2)
    B = _pick_b_tile(N, per_img, fixed, (vmem_limit * 3) // 5)
    G = N // B
    cp = pltpu.CompilerParams(dimension_semantics=("parallel",),
                              vmem_limit_bytes=vmem_limit)

    # ---- pass 1: conv1 (+ projection shortcut) + BN partial stats ------------
    in_specs = [pl.BlockSpec((P, B, Hq, Wq, Cs1), lambda n: (0, n, 0, 0, 0)),
                _resident_spec(w1m.shape)]
    args = [xph, w1m]
    out_shape = [jax.ShapeDtypeStruct((N, Ho, Wo, Cop), jnp.bfloat16),
                 jax.ShapeDtypeStruct((G, 2, Cop), jnp.float32)]
    out_specs = [pl.BlockSpec((B, Ho, Wo, Cop), lambda n: (n, 0, 0, 0)),
                 pl.BlockSpec((1, 2, Cop), lambda n: (n, 0, 0))]
    if project:
        in_specs.append(_resident_spec(wsc.shape))
        args.append(wsc)
        out_shape += [jax.ShapeDtypeStruct((N, Ho, Wo, Cop), jnp.bfloat16),
                      jax.ShapeDtypeStruct((G, 2, Cop), jnp.float32)]
        out_specs += [pl.BlockSpec((B, Ho, Wo, Cop), lambda n: (n, 0, 0, 0)),
                      pl.BlockSpec((1, 2, Cop), lambda n: (n, 0, 0))]
    scratch1 = [] if pack1 else [pltpu.VMEM((B * Ho * Wo, Cop), jnp.float32)]

    outs = pl.pallas_call(
        functools.partial(_conv1_kernel, taps, sc_tap, Ho, Wo, project, pack1),
        grid=(G,),
        in_specs=in_specs,
        out_specs=tuple(out_specs),
        out_shape=tuple(out_shape),
        scratch_shapes=scratch1,
        compiler_params=cp,
    )(*args)
    if project:
        y1, st1, ysc, stsc = outs
    else:
        y1, st1 = outs

    # tiny glue: reduce BN1 stats, fold gamma/beta into per-channel affine
    s1v, b1v = _bn_affine(st1, g1, b1, Mtot)

    # ---- pass 2: bn1+relu fused into conv2, + BN2 partial stats ---------------
    scratch2 = [pltpu.VMEM((B, Ho + 2, Wo + 2, Cs2), jnp.bfloat16)]
    if not pack2:
        scratch2.append(pltpu.VMEM((B * Ho * Wo, Cop), jnp.float32))
    y2, st2 = pl.pallas_call(
        functools.partial(_conv2_kernel, Ho, Wo, pack2),
        grid=(G,),
        in_specs=[pl.BlockSpec((B, Ho, Wo, Cop), lambda n: (n, 0, 0, 0)),
                  _resident_spec((1, Cop)),
                  _resident_spec((1, Cop)),
                  _resident_spec(w2m.shape)],
        out_specs=(pl.BlockSpec((B, Ho, Wo, Cop), lambda n: (n, 0, 0, 0)),
                   pl.BlockSpec((1, 2, Cop), lambda n: (n, 0, 0))),
        out_shape=(jax.ShapeDtypeStruct((N, Ho, Wo, Cop), jnp.bfloat16),
                   jax.ShapeDtypeStruct((G, 2, Cop), jnp.float32)),
        scratch_shapes=scratch2,
        compiler_params=cp,
    )(y1, s1v, b1v, w2m)

    s2v, b2v = _bn_affine(st2, g2, b2, Mtot)

    # ---- pass 3: bn2 + shortcut + relu (elementwise, single fused store) ------
    in_specs3 = [pl.BlockSpec((B, Ho, Wo, Cop), lambda n: (n, 0, 0, 0)),
                 _resident_spec((1, Cop)),
                 _resident_spec((1, Cop))]
    args3 = [y2, s2v, b2v]
    if project:
        gsc, bsc = _pad_vec(params["gsc"], Cop), _pad_vec(params["bsc"], Cop)
        sscv, bscv = _bn_affine(stsc, gsc, bsc, Mtot)
        in_specs3 += [pl.BlockSpec((B, Ho, Wo, Cop), lambda n: (n, 0, 0, 0)),
                      _resident_spec((1, Cop)),
                      _resident_spec((1, Cop))]
        args3 += [ysc, sscv, bscv]
    else:
        # identity shortcut: original input, channel-padded, exact f32
        x_id = jnp.pad(x, ((0, 0), (0, 0), (0, 0), (0, Cop - Cin)))
        in_specs3.append(pl.BlockSpec((B, Ho, Wo, Cop), lambda n: (n, 0, 0, 0)))
        args3.append(x_id)

    out = pl.pallas_call(
        functools.partial(_finalize_kernel, project),
        grid=(G,),
        in_specs=in_specs3,
        out_specs=pl.BlockSpec((B, Ho, Wo, Cop), lambda n: (n, 0, 0, 0)),
        out_shape=jax.ShapeDtypeStruct((N, Ho, Wo, Cop), jnp.float32),
        compiler_params=cp,
    )(*args3)

    # TODO(synk): when blocks are chained, keep the padded-NHWC layout and skip
    # this slice+transpose (pay layout conversion once per network).
    return jnp.transpose(out[:, :, :, :Cout], (0, 3, 1, 2))            # NCHW


# ---------------- pure-JAX reference (for correctness check) ----------------
def reference_forward(x_nchw, params, stride):
    x = jnp.transpose(x_nchw, (0, 2, 3, 1)).astype(jnp.float32)

    def conv(inp, w, s, pad):
        return lax.conv_general_dilated(
            inp, jnp.transpose(w, (2, 3, 1, 0)), (s, s),
            [(pad, pad), (pad, pad)],
            dimension_numbers=("NHWC", "HWIO", "NHWC"),
            precision=lax.Precision.HIGHEST)

    def bn(y, g, b):
        mean = jnp.mean(y, axis=(0, 1, 2), keepdims=True)
        var = jnp.mean((y - mean) ** 2, axis=(0, 1, 2), keepdims=True)
        return (y - mean) * lax.rsqrt(var + EPS) * g + b

    out = jax.nn.relu(bn(conv(x, params["w1"], stride, 1), params["g1"], params["b1"]))
    out = bn(conv(out, params["w2"], 1, 1), params["g2"], params["b2"])
    Cin, Cout = x.shape[-1], params["w1"].shape[0]
    if stride != 1 or Cin != Cout:
        sc = bn(conv(x, params["wsc"], stride, 0), params["gsc"], params["bsc"])
    else:
        sc = x
    return jnp.transpose(jax.nn.relu(out + sc), (0, 3, 1, 2))


if __name__ == "__main__":
    key = jax.random.PRNGKey(0)
    ks = jax.random.split(key, 16)
    TOL = 2e-2    # bf16 MXU operands / bf16 intermediates vs f32-HIGHEST reference

    # --- config 1: projection shortcut (stride=2, channel expansion) ---
    N, H, W = 2, 16, 16
    in_c, out_c, stride = 4, 8, 2
    params = {
        "w1":  0.1 * jax.random.normal(ks[0], (out_c, in_c, 3, 3), jnp.float32),
        "g1":  1.0 + 0.1 * jax.random.normal(ks[1], (out_c,), jnp.float32),
        "b1":  0.1 * jax.random.normal(ks[2], (out_c,), jnp.float32),
        "w2":  0.1 * jax.random.normal(ks[3], (out_c, out_c, 3, 3), jnp.float32),
        "g2":  1.0 + 0.1 * jax.random.normal(ks[4], (out_c,), jnp.float32),
        "b2":  0.1 * jax.random.normal(ks[5], (out_c,), jnp.float32),
        "wsc": 0.1 * jax.random.normal(ks[6], (out_c, in_c, 1, 1), jnp.float32),
        "gsc": 1.0 + 0.1 * jax.random.normal(ks[7], (out_c,), jnp.float32),
        "bsc": 0.1 * jax.random.normal(ks[8], (out_c,), jnp.float32),
    }
    x = jax.random.normal(ks[9], (N, in_c, H, W), jnp.float32)
    out = jax.block_until_ready(basic_block_forward(x, params, stride))
    ref = reference_forward(x, params, stride)
    np.testing.assert_allclose(np.asarray(out), np.asarray(ref), rtol=TOL, atol=TOL)
    assert out.shape == (N, out_c, H // stride, W // stride)

    # --- config 2: identity shortcut (stride=1, in_c == out_c) ---
    c2 = 8
    params2 = {
        "w1": 0.1 * jax.random.normal(ks[10], (c2, c2, 3, 3), jnp.float32),
        "g1": 1.0 + 0.1 * jax.random.normal(ks[11], (c2,), jnp.float32),
        "b1": 0.1 * jax.random.normal(ks[12], (c2,), jnp.float32),
        "w2": 0.1 * jax.random.normal(ks[13], (c2, c2, 3, 3), jnp.float32),
        "g2": 1.0 + 0.1 * jax.random.normal(ks[14], (c2,), jnp.float32),
        "b2": 0.1 * jax.random.normal(ks[15], (c2,), jnp.float32),
    }
    x2 = jax.random.normal(ks[9], (N, c2, H, W), jnp.float32)
    out2 = jax.block_until_ready(basic_block_forward(x2, params2, 1))
    ref2 = reference_forward(x2, params2, 1)
    np.testing.assert_allclose(np.asarray(out2), np.asarray(ref2), rtol=TOL, atol=TOL)
    assert out2.shape == (N, c2, H, W)

    print("KERNEL_OK")
</pallas_src>

<mosaic_0001>
module attributes {stable_mosaic.version = 11 : i64} {
  func.func @k(%arg0: i32, %arg1: memref<8x128xf32, #tpu.memory_space<vmem>>, %arg2: memref<8x128xf32, #tpu.memory_space<vmem>>) attributes {dimension_semantics = [#tpu.dimension_semantics<arbitrary>], iteration_bounds = array<i64: 2>, scalar_prefetch = 0 : i64, scratch_operands = 0 : i64, tpu.core_type = #tpu.core_type<tc>, window_params = [{pipeline_mode = #tpu.pipeline_mode<synchronous>, transform_indices = @transform_0, window_bounds = array<i64: 8, 128>}, {pipeline_mode = #tpu.pipeline_mode<synchronous>, transform_indices = @transform_1, window_bounds = array<i64: 8, 128>}]} {
    %c0 = arith.constant 0 : index
    %c0_0 = arith.constant 0 : index
    %0 = vector.load %arg1[%c0, %c0_0] : memref<8x128xf32, #tpu.memory_space<vmem>>, vector<8x128xf32>
    %cst = arith.constant 1.000000e+00 : f32
    %1 = vector.broadcast %cst : f32 to vector<8x128xf32>
    %2 = arith.addf %0, %1 : vector<8x128xf32>
    %c0_1 = arith.constant 0 : index
    %c0_2 = arith.constant 0 : index
    %3 = vector.load %arg2[%c0_1, %c0_2] : memref<8x128xf32, #tpu.memory_space<vmem>>, vector<8x128xf32>
    tpu.vector_store %arg2[%c0_1, %c0_2], %2 {strides = array<i32>} : memref<8x128xf32, #tpu.memory_space<vmem>>, vector<8x128xf32>,
    return
  }
  func.func @transform_0(%arg0: i32) -> (i32, i32) {
    %c0_i32 = arith.constant 0 : i32
    %c0_i32_0 = arith.constant 0 : i32
    %c0_i32_1 = arith.constant 0 : i32
    return %c0_i32, %c0_i32_0 : i32, i32
  }
  func.func @transform_1(%arg0: i32) -> (i32, i32) {
    %c0_i32 = arith.constant 0 : i32
    %c0_i32_0 = arith.constant 0 : i32
    %c0_i32_1 = arith.constant 0 : i32
    return %c0_i32, %c0_i32_0 : i32, i32
  }
}

module attributes {stable_mosaic.version = 11 : i64} {
  func.func @_conv1_kernel(%arg0: i32, %arg1: memref<4x1x9x9x4xbf16, #tpu.memory_space<vmem>>, %arg2: memref<36x128xbf16, #tpu.memory_space<vmem>>, %arg3: memref<4x128xbf16, #tpu.memory_space<vmem>>, %arg4: memref<1x8x8x128xbf16, #tpu.memory_space<vmem>>, %arg5: memref<1x2x128xf32, #tpu.memory_space<vmem>>, %arg6: memref<1x8x8x128xbf16, #tpu.memory_space<vmem>>, %arg7: memref<1x2x128xf32, #tpu.memory_space<vmem>>) attributes {dimension_semantics = [#tpu.dimension_semantics<parallel>], iteration_bounds = array<i64: 2>, scalar_prefetch = 0 : i64, scratch_operands = 0 : i64, tpu.core_type = #tpu.core_type<tc>, window_params = [{transform_indices = @transform_0, window_bounds = array<i64: 4, 1, 9, 9, 4>}, {pipeline_mode = #tpu.pipeline_mode<synchronous>, transform_indices = @transform_1, window_bounds = array<i64: 36, 128>}, {pipeline_mode = #tpu.pipeline_mode<synchronous>, transform_indices = @transform_2, window_bounds = array<i64: 4, 128>}, {transform_indices = @transform_3, window_bounds = array<i64: 1, 8, 8, 128>}, {transform_indices = @transform_4, window_bounds = array<i64: 1, 2, 128>}, {transform_indices = @transform_5, window_bounds = array<i64: 1, 8, 8, 128>}, {transform_indices = @transform_6, window_bounds = array<i64: 1, 2, 128>}]} {
    %c0 = arith.constant 0 : index
    %c0_0 = arith.constant 0 : index
    %c0_1 = arith.constant 0 : index
    %c0_2 = arith.constant 0 : index
    %c0_3 = arith.constant 0 : index
    %0 = vector.load %arg1[%c0, %c0_0, %c0_1, %c0_2, %c0_3] : memref<4x1x9x9x4xbf16, #tpu.memory_space<vmem>>, vector<1x1x8x8x4xbf16>
    %1 = vector.shape_cast %0 : vector<1x1x8x8x4xbf16> to vector<1x8x8x4xbf16>
    %c1 = arith.constant 1 : index
    %c0_4 = arith.constant 0 : index
    %c0_5 = arith.constant 0 : index
    %c0_6 = arith.constant 0 : index
    %c0_7 = arith.constant 0 : index
    %2 = vector.load %arg1[%c1, %c0_4, %c0_5, %c0_6, %c0_7] : memref<4x1x9x9x4xbf16, #tpu.memory_space<vmem>>, vector<1x1x8x8x4xbf16>
    %3 = vector.shape_cast %2 : vector<1x1x8x8x4xbf16> to vector<1x8x8x4xbf16>
    %c0_8 = arith.constant 0 : index
    %c0_9 = arith.constant 0 : index
    %c0_10 = arith.constant 0 : index
    %c1_11 = arith.constant 1 : index
    %c0_12 = arith.constant 0 : index
    %4 = vector.load %arg1[%c0_8, %c0_9, %c0_10, %c1_11, %c0_12] : memref<4x1x9x9x4xbf16, #tpu.memory_space<vmem>>, vector<1x1x8x8x4xbf16>
    %5 = vector.shape_cast %4 : vector<1x1x8x8x4xbf16> to vector<1x8x8x4xbf16>
    %c2 = arith.constant 2 : index
    %c0_13 = arith.constant 0 : index
    %c0_14 = arith.constant 0 : index
    %c0_15 = arith.constant 0 : index
    %c0_16 = arith.constant 0 : index
    %6 = vector.load %arg1[%c2, %c0_13, %c0_14, %c0_15, %c0_16] : memref<4x1x9x9x4xbf16, #tpu.memory_space<vmem>>, vector<1x1x8x8x4xbf16>
    %7 = vector.shape_cast %6 : vector<1x1x8x8x4xbf16> to vector<1x8x8x4xbf16>
    %c3 = arith.constant 3 : index
    %c0_17 = arith.constant 0 : index
    %c0_18 = arith.constant 0 : index
    %c0_19 = arith.constant 0 : index
    %c0_20 = arith.constant 0 : index
    %8 = vector.load %arg1[%c3, %c0_17, %c0_18, %c0_19, %c0_20] : memref<4x1x9x9x4xbf16, #tpu.memory_space<vmem>>, vector<1x1x8x8x4xbf16>
    %9 = vector.shape_cast %8 : vector<1x1x8x8x4xbf16> to vector<1x8x8x4xbf16>
    %c2_21 = arith.constant 2 : index
    %c0_22 = arith.constant 0 : index
    %c0_23 = arith.constant 0 : index
    %c1_24 = arith.constant 1 : index
    %c0_25 = arith.constant 0 : index
    %10 = vector.load %arg1[%c2_21, %c0_22, %c0_23, %c1_24, %c0_25] : memref<4x1x9x9x4xbf16, #tpu.memory_space<vmem>>, vector<1x1x8x8x4xbf16>
    %11 = vector.shape_cast %10 : vector<1x1x8x8x4xbf16> to vector<1x8x8x4xbf16>
    %c0_26 = arith.constant 0 : index
    %c0_27 = arith.constant 0 : index
    %c1_28 = arith.constant 1 : index
    %c0_29 = arith.constant 0 : index
    %c0_30 = arith.constant 0 : index
    %12 = vector.load %arg1[%c0_26, %c0_27, %c1_28, %c0_29, %c0_30] : memref<4x1x9x9x4xbf16, #tpu.memory_space<vmem>>, vector<1x1x8x8x4xbf16>
    %13 = vector.shape_cast %12 : vector<1x1x8x8x4xbf16> to vector<1x8x8x4xbf16>
    %c1_31 = arith.constant 1 : index
    %c0_32 = arith.constant 0 : index
    %c1_33 = arith.constant 1 : index
    %c0_34 = arith.constant 0 : index
    %c0_35 = arith.constant 0 : index
    %14 = vector.load %arg1[%c1_31, %c0_32, %c1_33, %c0_34, %c0_35] : memref<4x1x9x9x4xbf16, #tpu.memory_space<vmem>>, vector<1x1x8x8x4xbf16>
    %15 = vector.shape_cast %14 : vector<1x1x8x8x4xbf16> to vector<1x8x8x4xbf16>
    %c0_36 = arith.constant 0 : index
    %c0_37 = arith.constant 0 : index
    %c1_38 = arith.constant 1 : index
    %c1_39 = arith.constant 1 : index
    %c0_40 = arith.constant 0 : index
    %16 = vector.load %arg1[%c0_36, %c0_37, %c1_38, %c1_39, %c0_40] : memref<4x1x9x9x4xbf16, #tpu.memory_space<vmem>>, vector<1x1x8x8x4xbf16>
    %17 = vector.shape_cast %16 : vector<1x1x8x8x4xbf16> to vector<1x8x8x4xbf16>
    %18 = tpu.concatenate %1, %3, %5, %7, %9, %11, %13, %15, %17 in 3 : vector<1x8x8x4xbf16>, vector<1x8x8x4xbf16>, vector<1x8x8x4xbf16>, vector<1x8x8x4xbf16>, vector<1x8x8x4xbf16>, vector<1x8x8x4xbf16>, vector<1x8x8x4xbf16>, vector<1x8x8x4xbf16>, vector<1x8x8x4xbf16> -> vector<1x8x8x36xbf16>
    %19 = vector.shape_cast %18 : vector<1x8x8x36xbf16> to vector<64x36xbf16>
    %c0_41 = arith.constant 0 : index
    %c0_42 = arith.constant 0 : index
    %20 = vector.load %arg2[%c0_41, %c0_42] : memref<36x128xbf16, #tpu.memory_space<vmem>>, vector<36x128xbf16>
    %cst = arith.constant dense<0.000000e+00> : vector<64x128xf32>
    %21 = tpu.matmul %19, %20, %cst {dimension_numbers = #tpu.dot_dimension_numbers<[1], [0], [0], [1], [0, 0, 1, 1], [], []>} : vector<64x36xbf16>, vector<36x128xbf16>, vector<64x128xf32> -> vector<64x128xf32>
    %22 = vector.shape_cast %21 : vector<64x128xf32> to vector<1x8x8x128xf32>
    %23 = arith.truncf %22 : vector<1x8x8x128xf32> to vector<1x8x8x128xbf16>
    %c0_43 = arith.constant 0 : index
    %c0_44 = arith.constant 0 : index
    %c0_45 = arith.constant 0 : index
    %c0_46 = arith.constant 0 : index
    %24 = vector.load %arg4[%c0_43, %c0_44, %c0_45, %c0_46] : memref<1x8x8x128xbf16, #tpu.memory_space<vmem>>, vector<1x8x8x128xbf16>
    tpu.vector_store %arg4[%c0_43, %c0_44, %c0_45, %c0_46], %23 {strides = array<i32>} : memref<1x8x8x128xbf16, #tpu.memory_space<vmem>>, vector<1x8x8x128xbf16>,
    %cst_47 = arith.constant dense<0.000000e+00> : vector<128xf32>
    %25 = vector.multi_reduction <add>, %21, %cst_47 [0] : vector<64x128xf32> to vector<128xf32>
    %26 = vector.shape_cast %25 : vector<128xf32> to vector<1x128xf32>
    %c0_48 = arith.constant 0 : index
    %c0_49 = arith.constant 0 : index
    %c0_50 = arith.constant 0 : index
    %27 = vector.load %arg5[%c0_48, %c0_49, %c0_50] : memref<1x2x128xf32, #tpu.memory_space<vmem>>, vector<1x1x128xf32>
    %28 = vector.shape_cast %27 : vector<1x1x128xf32> to vector<1x128xf32>
    %29 = vector.shape_cast %26 : vector<1x128xf32> to vector<1x1x128xf32>
    tpu.vector_store %arg5[%c0_48, %c0_49, %c0_50], %29 {strides = array<i32>} : memref<1x2x128xf32, #tpu.memory_space<vmem>>, vector<1x1x128xf32>,
    %30 = arith.mulf %21, %21 : vector<64x128xf32>
    %cst_51 = arith.constant dense<0.000000e+00> : vector<128xf32>
    %31 = vector.multi_reduction <add>, %30, %cst_51 [0] : vector<64x128xf32> to vector<128xf32>
    %32 = vector.shape_cast %31 : vector<128xf32> to vector<1x128xf32>
    %c0_52 = arith.constant 0 : index
    %c1_53 = arith.constant 1 : index
    %c0_54 = arith.constant 0 : index
    %33 = vector.load %arg5[%c0_52, %c1_53, %c0_54] : memref<1x2x128xf32, #tpu.memory_space<vmem>>, vector<1x1x128xf32>
    %34 = vector.shape_cast %33 : vector<1x1x128xf32> to vector<1x128xf32>
    %35 = vector.shape_cast %32 : vector<1x128xf32> to vector<1x1x128xf32>
    tpu.vector_store %arg5[%c0_52, %c1_53, %c0_54], %35 {strides = array<i32>} : memref<1x2x128xf32, #tpu.memory_space<vmem>>, vector<1x1x128xf32>,
    %c3_55 = arith.constant 3 : index
    %c0_56 = arith.constant 0 : index
    %c0_57 = arith.constant 0 : index
    %c0_58 = arith.constant 0 : index
    %c0_59 = arith.constant 0 : index
    %36 = vector.load %arg1[%c3_55, %c0_56, %c0_57, %c0_58, %c0_59] : memref<4x1x9x9x4xbf16, #tpu.memory_space<vmem>>, vector<1x1x8x8x4xbf16>
    %37 = vector.shape_cast %36 : vector<1x1x8x8x4xbf16> to vector<1x8x8x4xbf16>
    %38 = vector.shape_cast %37 : vector<1x8x8x4xbf16> to vector<64x4xbf16>
    %c0_60 = arith.constant 0 : index
    %c0_61 = arith.constant 0 : index
    %39 = vector.load %arg3[%c0_60, %c0_61] : memref<4x128xbf16, #tpu.memory_space<vmem>>, vector<4x128xbf16>
    %cst_62 = arith.constant dense<0.000000e+00> : vector<64x128xf32>
    %40 = tpu.matmul %38, %39, %cst_62 {dimension_numbers = #tpu.dot_dimension_numbers<[1], [0], [0], [1], [0, 0, 1, 1], [], []>} : vector<64x4xbf16>, vector<4x128xbf16>, vector<64x128xf32> -> vector<64x128xf32>
    %41 = vector.shape_cast %40 : vector<64x128xf32> to vector<1x8x8x128xf32>
    %42 = arith.truncf %41 : vector<1x8x8x128xf32> to vector<1x8x8x128xbf16>
    %c0_63 = arith.constant 0 : index
    %c0_64 = arith.constant 0 : index
    %c0_65 = arith.constant 0 : index
    %c0_66 = arith.constant 0 : index
    %43 = vector.load %arg6[%c0_63, %c0_64, %c0_65, %c0_66] : memref<1x8x8x128xbf16, #tpu.memory_space<vmem>>, vector<1x8x8x128xbf16>
    tpu.vector_store %arg6[%c0_63, %c0_64, %c0_65, %c0_66], %42 {strides = array<i32>} : memref<1x8x8x128xbf16, #tpu.memory_space<vmem>>, vector<1x8x8x128xbf16>,
    %cst_67 = arith.constant dense<0.000000e+00> : vector<128xf32>
    %44 = vector.multi_reduction <add>, %40, %cst_67 [0] : vector<64x128xf32> to vector<128xf32>
    %45 = vector.shape_cast %44 : vector<128xf32> to vector<1x128xf32>
    %c0_68 = arith.constant 0 : index
    %c0_69 = arith.constant 0 : index
    %c0_70 = arith.constant 0 : index
    %46 = vector.load %arg7[%c0_68, %c0_69, %c0_70] : memref<1x2x128xf32, #tpu.memory_space<vmem>>, vector<1x1x128xf32>
    %47 = vector.shape_cast %46 : vector<1x1x128xf32> to vector<1x128xf32>
    %48 = vector.shape_cast %45 : vector<1x128xf32> to vector<1x1x128xf32>
    tpu.vector_store %arg7[%c0_68, %c0_69, %c0_70], %48 {strides = array<i32>} : memref<1x2x128xf32, #tpu.memory_space<vmem>>, vector<1x1x128xf32>,
    %49 = arith.mulf %40, %40 : vector<64x128xf32>
    %cst_71 = arith.constant dense<0.000000e+00> : vector<128xf32>
    %50 = vector.multi_reduction <add>, %49, %cst_71 [0] : vector<64x128xf32> to vector<128xf32>
    %51 = vector.shape_cast %50 : vector<128xf32> to vector<1x128xf32>
    %c0_72 = arith.constant 0 : index
    %c1_73 = arith.constant 1 : index
    %c0_74 = arith.constant 0 : index
    %52 = vector.load %arg7[%c0_72, %c1_73, %c0_74] : memref<1x2x128xf32, #tpu.memory_space<vmem>>, vector<1x1x128xf32>
    %53 = vector.shape_cast %52 : vector<1x1x128xf32> to vector<1x128xf32>
    %54 = vector.shape_cast %51 : vector<1x128xf32> to vector<1x1x128xf32>
    tpu.vector_store %arg7[%c0_72, %c1_73, %c0_74], %54 {strides = array<i32>} : memref<1x2x128xf32, #tpu.memory_space<vmem>>, vector<1x1x128xf32>,
    return
  }
  func.func @transform_0(%arg0: i32) -> (i32, i32, i32, i32, i32) {
    %c0_i32 = arith.constant 0 : i32
    %c0_i32_0 = arith.constant 0 : i32
    %c0_i32_1 = arith.constant 0 : i32
    %c0_i32_2 = arith.constant 0 : i32
    %c0_i32_3 = arith.constant 0 : i32
    return %c0_i32, %arg0, %c0_i32_0, %c0_i32_1, %c0_i32_2 : i32, i32, i32, i32, i32
  }
  func.func @transform_1(%arg0: i32) -> (i32, i32) {
    %c0_i32 = arith.constant 0 : i32
    %c0_i32_0 = arith.constant 0 : i32
    %c0_i32_1 = arith.constant 0 : i32
    return %c0_i32, %c0_i32_0 : i32, i32
  }
  func.func @transform_2(%arg0: i32) -> (i32, i32) {
    %c0_i32 = arith.constant 0 : i32
    %c0_i32_0 = arith.constant 0 : i32
    %c0_i32_1 = arith.constant 0 : i32
    return %c0_i32, %c0_i32_0 : i32, i32
  }
  func.func @transform_3(%arg0: i32) -> (i32, i32, i32, i32) {
    %c0_i32 = arith.constant 0 : i32
    %c0_i32_0 = arith.constant 0 : i32
    %c0_i32_1 = arith.constant 0 : i32
    %c0_i32_2 = arith.constant 0 : i32
    return %arg0, %c0_i32, %c0_i32_0, %c0_i32_1 : i32, i32, i32, i32
  }
  func.func @transform_4(%arg0: i32) -> (i32, i32, i32) {
    %c0_i32 = arith.constant 0 : i32
    %c0_i32_0 = arith.constant 0 : i32
    %c0_i32_1 = arith.constant 0 : i32
    return %arg0, %c0_i32, %c0_i32_0 : i32, i32, i32
  }
  func.func @transform_5(%arg0: i32) -> (i32, i32, i32, i32) {
    %c0_i32 = arith.constant 0 : i32
    %c0_i32_0 = arith.constant 0 : i32
    %c0_i32_1 = arith.constant 0 : i32
    %c0_i32_2 = arith.constant 0 : i32
    return %arg0, %c0_i32, %c0_i32_0, %c0_i32_1 : i32, i32, i32, i32
  }
  func.func @transform_6(%arg0: i32) -> (i32, i32, i32) {
    %c0_i32 = arith.constant 0 : i32
    %c0_i32_0 = arith.constant 0 : i32
    %c0_i32_1 = arith.constant 0 : i32
    return %arg0, %c0_i32, %c0_i32_0 : i32, i32, i32
  }
}

</mosaic_0001>

<llo_original>
// kernel: tpu_custom_call.1
$region0: #{tpu_custom_call.1}
  #allocation0 [shape = 'u32[]', space=smem, size = 0x4, offset = 0x4, fixed_abs, tag = 'smem constant byte address 0x4 - core index']
  #allocation1 [shape = 'u32[144,128]{1,0:T(1,128)}', space=vmem, size = 0x12000, scoped, tag = 'internal scratch']
  %s0 = inlined_call_operand.hbm [shape: f32[8,128], index: 0, kind: input, shape index: {}]
  %s1 = inlined_call_operand.hbm [shape: f32[8,128], index: 1, kind: output, shape index: {}]
  %s2 = sld [smem:[#allocation0]]
  $region41: #{tpu_custom_call.1} parent=0
    _
  %s4 = ssub.s32 1, %s2
  %s5 = scalar_select 0, %s4, %s2
  $region1: #{tpu_custom_call.1} parent=0
    #allocation2 [shape = 'u8[4096]{0}', space=vmem, size = 0x1000, scoped, tag = 'input window, operand 0, single buffered']
    #allocation3 [shape = 's32[2]{0}', space=sflag, size = 0x8, scoped, tag = 'scoped memory for tpu_custom_call.1']
    #allocation4 [shape = 's32[2]{0}', space=sflag, size = 0x8, scoped, tag = 'scoped memory for tpu_custom_call.1']
    #allocation5 [shape = 'u8[4096]{0}', space=vmem, size = 0x1000, scoped, tag = 'output window, operand 0, single buffered']
    %6 = vsyncpa [#allocation3], 0
    %7 = vsyncpa [#allocation4], 0
    loop: start=0, step=1, limit=4
    $region2: #{tpu_custom_call.1} parent=1 // loop_pre_header
      _
    $region3: #{tpu_custom_call.1} parent=1 // loop_header
      %s9 = sphi 0, %s13
      %p10 = scmp.ge.s32.totalorder %s9, 4
      %s17 = sphi 0, %s17
      %s19 = sphi 0, %s17
      %s20 = sphi 0, %s19
      %s34 = sphi 0, %s20
      %s38 = sphi 0, %s38
      %s40 = sphi 0, %s38
      %s41 = sphi 0, %s40
      %s55 = sphi 0, %s41
    $region4: #{tpu_custom_call.1} parent=1 // loop_header_branch
      %12 = sbr.rel (%p10) target = $region8
    $region5: #{tpu_custom_call.1} parent=1 // loop_body
      %s14 = ssub.s32 %s9, 1
      %s15 = ssub.s32 %s9, 2
      %s16 = sadd.s32 %s9, 1
      %s18 = sadd.s32 %s17, 1
      %p21 = scmp.eq.s32.totalorder %s9, 1
      %p22 = scmp.ne.s32.totalorder %s17, %s19
      %p23 = scmp.eq.s32.totalorder %s9, 0
      %p24 = por %p22, %p23
      %p25 = scmp.ne.s32.totalorder %s17, %s19
      %p26 = scmp.eq.s32.totalorder %s14, 1
      %p27 = por %p25, %p26
      %p28 = scmp.ne.s32.totalorder %s19, %s20
      %p29 = scmp.eq.s32.totalorder %s14, 0
      %p30 = por %p28, %p29
      %p31 = scmp.ne.s32.totalorder %s19, %s20
      %p32 = scmp.eq.s32.totalorder %s15, 1
      %p33 = por %p31, %p32
      %p35 = scmp.ne.s32.totalorder %s20, %s34
      %p36 = scmp.eq.s32.totalorder %s15, 0
      %p37 = por %p35, %p36
      %s39 = sadd.s32 %s38, 1
      %p42 = scmp.eq.s32.totalorder %s9, 1
      %p43 = scmp.ne.s32.totalorder %s38, %s40
      %p44 = scmp.eq.s32.totalorder %s9, 0
      %p45 = por %p43, %p44
      %p46 = scmp.ne.s32.totalorder %s38, %s40
      %p47 = scmp.eq.s32.totalorder %s14, 1
      %p48 = por %p46, %p47
      %p49 = scmp.ne.s32.totalorder %s40, %s41
      %p50 = scmp.eq.s32.totalorder %s14, 0
      %p51 = por %p49, %p50
      %p52 = scmp.ne.s32.totalorder %s40, %s41
      %p53 = scmp.eq.s32.totalorder %s15, 1
      %p54 = por %p52, %p53
      %p56 = scmp.ne.s32.totalorder %s41, %s55
      %p57 = scmp.eq.s32.totalorder %s15, 0
      %p58 = por %p56, %p57
      %p59 = scmp.le.s32.totalorder 1, %s9
      %p60 = scmp.lt.s32.totalorder %s9, 3
      %p61 = pnand %p59, %p60
      %p62 = pneg %p61
      // Predicated region
      $region9: #{tpu_custom_call.1} parent=5 // pred_check
        _
      $region10: #{tpu_custom_call.1} parent=5 // pred_check_branch
        %64 = sbr.rel (%p61) target = $region12
      $region11: #{tpu_custom_call.1} parent=5 // pred_region
        %s65 = ssub.s32 %s9, 1
        // Predicated region
        $region13: #{tpu_custom_call.1} parent=11 // pred_check
          %p66 = pneg %p30
        $region14: #{tpu_custom_call.1} parent=11 // pred_check_branch
          %68 = sbr.rel (%p66) target = $region16
        $region15: #{tpu_custom_call.1} parent=11 // pred_region
          %s70 = ssub.s32 128, 128
          %71 = vsyncadd [#allocation3], %s70
          %s73 = sshll.u32 [#allocation2], 4
          %s74 = int_to_ptr.vmem [resolvable:$true] %s73
          %76 = dma.hbm_to_vmem [thread:$0]  %s0, 128, %s74, [#allocation3]
        $region16: #{tpu_custom_call.1} parent=11 // pred_fallthru
          _
      $region12: #{tpu_custom_call.1} parent=5 // pred_fallthru
        _
      %p77 = scmp.lt.s32.totalorder %s9, 2
      // Predicated region
      $region17: #{tpu_custom_call.1} parent=5 // pred_check
        %p78 = pneg %p77
      $region18: #{tpu_custom_call.1} parent=5 // pred_check_branch
        %80 = sbr.rel (%p78) target = $region20
      $region19: #{tpu_custom_call.1} parent=5 // pred_region
        _
      $region20: #{tpu_custom_call.1} parent=5 // pred_fallthru
        _
      %p81 = scmp.le.s32.totalorder 1, %s9
      %p82 = scmp.lt.s32.totalorder %s9, 3
      %p83 = pnand %p81, %p82
      %p84 = pneg %p83
      // Predicated region
      $region21: #{tpu_custom_call.1} parent=5 // pred_check
        _
      $region22: #{tpu_custom_call.1} parent=5 // pred_check_branch
        %86 = sbr.rel (%p83) target = $region24
      $region23: #{tpu_custom_call.1} parent=5 // pred_region
        %s87 = ssub.s32 %s9, 1
        // Predicated region
        $region25: #{tpu_custom_call.1} parent=23 // pred_check
          %p88 = pneg %p30
        $region26: #{tpu_custom_call.1} parent=23 // pred_check_branch
          %90 = sbr.rel (%p88) target = $region28
        $region27: #{tpu_custom_call.1} parent=23 // pred_region
          %91 = dma.done [#allocation3], 128
        $region28: #{tpu_custom_call.1} parent=23 // pred_fallthru
          _
        %p92 = pneg %p30
        %p93 = pneg %p27
        %p94 = pneg %p51
        %p95 = pneg %p48
        %v96 = vld [vmem:[#allocation2] sm:$0xff]
        %v97 = vadd.f32 %v96, 1.0
        %98 = vst [vmem:[#allocation5] sm:$0xff] %v97
        // Predicated region
        $region29: #{tpu_custom_call.1} parent=23 // pred_check
          %p99 = pneg %p48
        $region30: #{tpu_custom_call.1} parent=23 // pred_check_branch
          %101 = sbr.rel (%p99) target = $region32
        $region31: #{tpu_custom_call.1} parent=23 // pred_region
          %s103 = ssub.s32 128, 128
          %104 = vsyncadd [#allocation4], %s103
          %s106 = sshll.u32 [#allocation5], 4
          %s107 = int_to_ptr.vmem [resolvable:$true] %s106
          %109 = dma.vmem_to_hbm [thread:$0]  %s107, 128, %s1, [#allocation4]
        $region32: #{tpu_custom_call.1} parent=23 // pred_fallthru
          _
        // Predicated region
        $region33: #{tpu_custom_call.1} parent=23 // pred_check
          %p110 = pneg %p48
        $region34: #{tpu_custom_call.1} parent=23 // pred_check_branch
          %112 = sbr.rel (%p110) target = $region36
        $region35: #{tpu_custom_call.1} parent=23 // pred_region
          %113 = dma.done [#allocation4], 128
        $region36: #{tpu_custom_call.1} parent=23 // pred_fallthru
          _
      $region24: #{tpu_custom_call.1} parent=5 // pred_fallthru
        _
      %p114 = scmp.le.s32.totalorder 2, %s9
      // Predicated region
      $region37: #{tpu_custom_call.1} parent=5 // pred_check
        %p115 = pneg %p114
      $region38: #{tpu_custom_call.1} parent=5 // pred_check_branch
        %117 = sbr.rel (%p115) target = $region40
      $region39: #{tpu_custom_call.1} parent=5 // pred_region
        %s118 = ssub.s32 %s9, 2
      $region40: #{tpu_custom_call.1} parent=5 // pred_fallthru
        _
    $region6: #{tpu_custom_call.1} parent=1 // loop_footer
      %s13 = sadd.s32 1, %s9
    $region7: #{tpu_custom_call.1} parent=1 // loop_footer_branch
      %8 = sbr.rel target = $region3
    $region8: #{tpu_custom_call.1} parent=1 // loop_exit
      _
    %119 = vsyncpa [#allocation3], 1
    %s120 = scalar_lea.sflag [#allocation3], 1
    %121 = vsyncpa %s120, 1
    %122 = vsyncpa [#allocation4], 1
    %s123 = scalar_lea.sflag [#allocation4], 1
    %124 = vsyncpa %s123, 1

// kernel: tpu_custom_call.1
$region0: #{tpu_custom_call.1}
  #allocation0 [shape = 'u32[]', space=smem, size = 0x4, offset = 0x4, fixed_abs, tag = 'smem constant byte address 0x4 - core index']
  #allocation1 [shape = 'u32[144,128]{1,0:T(1,128)}', space=vmem, size = 0x12000, scoped, tag = 'internal scratch']
  %s0 = inlined_call_operand.vmem [shape: bf16[4,2,9,9,4], index: 0, kind: input, shape index: {}]
  %s1 = inlined_call_operand.vmem [shape: bf16[36,128], index: 1, kind: input, shape index: {}]
  %s2 = inlined_call_operand.vmem [shape: bf16[4,128], index: 2, kind: input, shape index: {}]
  %s3 = inlined_call_operand.hbm [shape: bf16[2,8,8,128], index: 3, kind: output, shape index: {0}]
  %s4 = inlined_call_operand.hbm [shape: f32[2,2,128], index: 4, kind: output, shape index: {1}]
  %s5 = inlined_call_operand.hbm [shape: bf16[2,8,8,128], index: 5, kind: output, shape index: {2}]
  %s6 = inlined_call_operand.hbm [shape: f32[2,2,128], index: 6, kind: output, shape index: {3}]
  %7 = xla_tuple %s3, %s4, %s5, %s6
  %s8 = sld [smem:[#allocation0]]
  $region110: #{tpu_custom_call.1} parent=0
    _
  %s10 = ssub.s32 1, %s8
  %s11 = scalar_select 0, %s10, %s8
  $region1: #{tpu_custom_call.1} parent=0
    #allocation2 [shape = 'u8[294912]{0}', space=vmem, size = 0x48000, scoped, tag = 'input window, operand 0']
    #allocation3 [shape = 'u8[32768]{0}', space=vmem, size = 0x8000, scoped, tag = 'output window, operand 0']
    #allocation4 [shape = 's32[2]{0}', space=sflag, size = 0x8, scoped, tag = 'scoped memory for tpu_custom_call.1']
    #allocation5 [shape = 'u8[2048]{0}', space=vmem, size = 0x800, scoped, tag = 'output window, operand 1']
    #allocation6 [shape = 's32[2]{0}', space=sflag, size = 0x8, scoped, tag = 'scoped memory for tpu_custom_call.1']
    #allocation7 [shape = 'u8[32768]{0}', space=vmem, size = 0x8000, scoped, tag = 'output window, operand 2']
    #allocation8 [shape = 'u8[2048]{0}', space=vmem, size = 0x800, scoped, tag = 'output window, operand 3']
    #allocation9 [shape = 's32[2]{0}', space=sflag, size = 0x8, scoped, tag = 'scoped memory for tpu_custom_call.1']
    %12 = vsyncpa [#allocation4], 0
    %s13 = scalar_lea.sflag [#allocation4], 1
    %14 = vsyncpa %s13, 0
    %15 = vsyncpa [#allocation6], 0
    %s16 = scalar_lea.sflag [#allocation6], 1
    %17 = vsyncpa %s16, 0
    %18 = vsyncpa [#allocation9], 0
    %s19 = scalar_lea.sflag [#allocation9], 1
    %20 = vsyncpa %s19, 0
    loop: start=0, step=1, limit=4
    $region2: #{tpu_custom_call.1} parent=1 // loop_pre_header
      _
    $region3: #{tpu_custom_call.1} parent=1 // loop_header
      %s22 = sphi 0, %s26
      %p23 = scmp.ge.s32.totalorder %s22, 4
      %s32 = sphi 0, %s34
      %s35 = sphi 0, %s32
      %s36 = sphi 0, %s35
      %s52 = sphi 0, %s36
      %s56 = sphi 0, %s56
      %s58 = sphi 0, %s56
      %s59 = sphi 0, %s58
      %s73 = sphi 0, %s59
      %s77 = sphi 0, %s77
      %s79 = sphi 0, %s77
      %s80 = sphi 0, %s79
      %s94 = sphi 0, %s80
      %s100 = sphi 0, %s102
      %s103 = sphi 0, %s100
      %s104 = sphi 0, %s103
      %s120 = sphi 0, %s104
      %s126 = sphi 0, %s128
      %s129 = sphi 0, %s126
      %s130 = sphi 0, %s129
      %s146 = sphi 0, %s130
      %s152 = sphi 0, %s154
      %s155 = sphi 0, %s152
      %s156 = sphi 0, %s155
      %s172 = sphi 0, %s156
      %s178 = sphi 0, %s180
      %s181 = sphi 0, %s178
      %s182 = sphi 0, %s181
      %s198 = sphi 0, %s182
    $region4: #{tpu_custom_call.1} parent=1 // loop_header_branch
      %25 = sbr.rel (%p23) target = $region8
    $region5: #{tpu_custom_call.1} parent=1 // loop_body
      %s27 = ssub.s32 %s22, 1
      %s28 = ssub.s32 %s22, 2
      %s29 = sadd.s32 %s22, 1
      %s30 = ssub.s32 %s22, %s29
      %p31 = scmp.eq.s32.totalorder %s30, 0
      %s33 = sadd.s32 %s32, 1
      %s34 = scalar_select %p31, %s32, %s33
      %p37 = pneg %p31
      %p38 = scmp.eq.s32.totalorder %s22, 1
      %p39 = por %p37, %p38
      %p40 = scmp.ne.s32.totalorder %s32, %s35
      %p41 = scmp.eq.s32.totalorder %s22, 0
      %p42 = por %p40, %p41
      %p43 = scmp.ne.s32.totalorder %s32, %s35
      %p44 = scmp.eq.s32.totalorder %s27, 1
      %p45 = por %p43, %p44
      %p46 = scmp.ne.s32.totalorder %s35, %s36
      %p47 = scmp.eq.s32.totalorder %s27, 0
      %p48 = por %p46, %p47
      %p49 = scmp.ne.s32.totalorder %s35, %s36
      %p50 = scmp.eq.s32.totalorder %s28, 1
      %p51 = por %p49, %p50
      %p53 = scmp.ne.s32.totalorder %s36, %s52
      %p54 = scmp.eq.s32.totalorder %s28, 0
      %p55 = por %p53, %p54
      %s57 = sadd.s32 %s56, 1
      %p60 = scmp.eq.s32.totalorder %s22, 1
      %p61 = scmp.ne.s32.totalorder %s56, %s58
      %p62 = scmp.eq.s32.totalorder %s22, 0
      %p63 = por %p61, %p62
      %p64 = scmp.ne.s32.totalorder %s56, %s58
      %p65 = scmp.eq.s32.totalorder %s27, 1
      %p66 = por %p64, %p65
      %p67 = scmp.ne.s32.totalorder %s58, %s59
      %p68 = scmp.eq.s32.totalorder %s27, 0
      %p69 = por %p67, %p68
      %p70 = scmp.ne.s32.totalorder %s58, %s59
      %p71 = scmp.eq.s32.totalorder %s28, 1
      %p72 = por %p70, %p71
      %p74 = scmp.ne.s32.totalorder %s59, %s73
      %p75 = scmp.eq.s32.totalorder %s28, 0
      %p76 = por %p74, %p75
      %s78 = sadd.s32 %s77, 1
      %p81 = scmp.eq.s32.totalorder %s22, 1
      %p82 = scmp.ne.s32.totalorder %s77, %s79
      %p83 = scmp.eq.s32.totalorder %s22, 0
      %p84 = por %p82, %p83
      %p85 = scmp.ne.s32.totalorder %s77, %s79
      %p86 = scmp.eq.s32.totalorder %s27, 1
      %p87 = por %p85, %p86
      %p88 = scmp.ne.s32.totalorder %s79, %s80
      %p89 = scmp.eq.s32.totalorder %s27, 0
      %p90 = por %p88, %p89
      %p91 = scmp.ne.s32.totalorder %s79, %s80
      %p92 = scmp.eq.s32.totalorder %s28, 1
      %p93 = por %p91, %p92
      %p95 = scmp.ne.s32.totalorder %s80, %s94
      %p96 = scmp.eq.s32.totalorder %s28, 0
      %p97 = por %p95, %p96
      %s98 = ssub.s32 %s22, %s29
      %p99 = scmp.eq.s32.totalorder %s98, 0
      %s101 = sadd.s32 %s100, 1
      %s102 = scalar_select %p99, %s100, %s101
      %p105 = pneg %p99
      %p106 = scmp.eq.s32.totalorder %s22, 1
      %p107 = por %p105, %p106
      %p108 = scmp.ne.s32.totalorder %s100, %s103
      %p109 = scmp.eq.s32.totalorder %s22, 0
      %p110 = por %p108, %p109
      %p111 = scmp.ne.s32.totalorder %s100, %s103
      %p112 = scmp.eq.s32.totalorder %s27, 1
      %p113 = por %p111, %p112
      %p114 = scmp.ne.s32.totalorder %s103, %s104
      %p115 = scmp.eq.s32.totalorder %s27, 0
      %p116 = por %p114, %p115
      %p117 = scmp.ne.s32.totalorder %s103, %s104
      %p118 = scmp.eq.s32.totalorder %s28, 1
      %p119 = por %p117, %p118
      %p121 = scmp.ne.s32.totalorder %s104, %s120
      %p122 = scmp.eq.s32.totalorder %s28, 0
      %p123 = por %p121, %p122
      %s124 = ssub.s32 %s22, %s29
      %p125 = scmp.eq.s32.totalorder %s124, 0
      %s127 = sadd.s32 %s126, 1
      %s128 = scalar_select %p125, %s126, %s127
      %p131 = pneg %p125
      %p132 = scmp.eq.s32.totalorder %s22, 1
      %p133 = por %p131, %p132
      %p134 = scmp.ne.s32.totalorder %s126, %s129
      %p135 = scmp.eq.s32.totalorder %s22, 0
      %p136 = por %p134, %p135
      %p137 = scmp.ne.s32.totalorder %s126, %s129
      %p138 = scmp.eq.s32.totalorder %s27, 1
      %p139 = por %p137, %p138
      %p140 = scmp.ne.s32.totalorder %s129, %s130
      %p141 = scmp.eq.s32.totalorder %s27, 0
      %p142 = por %p140, %p141
      %p143 = scmp.ne.s32.totalorder %s129, %s130
      %p144 = scmp.eq.s32.totalorder %s28, 1
      %p145 = por %p143, %p144
      %p147 = scmp.ne.s32.totalorder %s130, %s146
      %p148 = scmp.eq.s32.totalorder %s28, 0
      %p149 = por %p147, %p148
      %s150 = ssub.s32 %s22, %s29
      %p151 = scmp.eq.s32.totalorder %s150, 0
      %s153 = sadd.s32 %s152, 1
      %s154 = scalar_select %p151, %s152, %s153
      %p157 = pneg %p151
      %p158 = scmp.eq.s32.totalorder %s22, 1
      %p159 = por %p157, %p158
      %p160 = scmp.ne.s32.totalorder %s152, %s155
      %p161 = scmp.eq.s32.totalorder %s22, 0
      %p162 = por %p160, %p161
      %p163 = scmp.ne.s32.totalorder %s152, %s155
      %p164 = scmp.eq.s32.totalorder %s27, 1
      %p165 = por %p163, %p164
      %p166 = scmp.ne.s32.totalorder %s155, %s156
      %p167 = scmp.eq.s32.totalorder %s27, 0
      %p168 = por %p166, %p167
      %p169 = scmp.ne.s32.totalorder %s155, %s156
      %p170 = scmp.eq.s32.totalorder %s28, 1
      %p171 = por %p169, %p170
      %p173 = scmp.ne.s32.totalorder %s156, %s172
      %p174 = scmp.eq.s32.totalorder %s28, 0
      %p175 = por %p173, %p174
      %s176 = ssub.s32 %s22, %s29
      %p177 = scmp.eq.s32.totalorder %s176, 0
      %s179 = sadd.s32 %s178, 1
      %s180 = scalar_select %p177, %s178, %s179
      %p183 = pneg %p177
      %p184 = scmp.eq.s32.totalorder %s22, 1
      %p185 = por %p183, %p184
      %p186 = scmp.ne.s32.totalorder %s178, %s181
      %p187 = scmp.eq.s32.totalorder %s22, 0
      %p188 = por %p186, %p187
      %p189 = scmp.ne.s32.totalorder %s178, %s181
      %p190 = scmp.eq.s32.totalorder %s27, 1
      %p191 = por %p189, %p190
      %p192 = scmp.ne.s32.totalorder %s181, %s182
      %p193 = scmp.eq.s32.totalorder %s27, 0
      %p194 = por %p192, %p193
      %p195 = scmp.ne.s32.totalorder %s181, %s182
      %p196 = scmp.eq.s32.totalorder %s28, 1
      %p197 = por %p195, %p196
      %p199 = scmp.ne.s32.totalorder %s182, %s198
      %p200 = scmp.eq.s32.totalorder %s28, 0
      %p201 = por %p199, %p200
      %p202 = scmp.le.s32.totalorder 1, %s22
      %p203 = scmp.lt.s32.totalorder %s22, 3
      %p204 = pnand %p202, %p203
      %p205 = pneg %p204
      // Predicated region
      $region9: #{tpu_custom_call.1} parent=5 // pred_check
        _
      $region10: #{tpu_custom_call.1} parent=5 // pred_check_branch
        %207 = sbr.rel (%p204) target = $region12
      $region11: #{tpu_custom_call.1} parent=5 // pred_region
        %s208 = ssub.s32 %s22, 1
        // Predicated region
        $region13: #{tpu_custom_call.1} parent=11 // pred_check
          %p209 = pneg %p69
        $region14: #{tpu_custom_call.1} parent=11 // pred_check_branch
          %211 = sbr.rel (%p209) target = $region16
        $region15: #{tpu_custom_call.1} parent=11 // pred_region
          _
        $region16: #{tpu_custom_call.1} parent=11 // pred_fallthru
          _
        // Predicated region
        $region17: #{tpu_custom_call.1} parent=11 // pred_check
          %p212 = pneg %p90
        $region18: #{tpu_custom_call.1} parent=11 // pred_check_branch
          %214 = sbr.rel (%p212) target = $region20
        $region19: #{tpu_custom_call.1} parent=11 // pred_region
          _
        $region20: #{tpu_custom_call.1} parent=11 // pred_fallthru
          _
      $region12: #{tpu_custom_call.1} parent=5 // pred_fallthru
        _
      %p215 = scmp.lt.s32.totalorder %s22, 2
      // Predicated region
      $region21: #{tpu_custom_call.1} parent=5 // pred_check
        %p216 = pneg %p215
      $region22: #{tpu_custom_call.1} parent=5 // pred_check_branch
        %218 = sbr.rel (%p216) target = $region24
      $region23: #{tpu_custom_call.1} parent=5 // pred_region
        // Predicated region
        $region25: #{tpu_custom_call.1} parent=23 // pred_check
          %p219 = pneg %p42
        $region26: #{tpu_custom_call.1} parent=23 // pred_check_branch
          %221 = sbr.rel (%p219) target = $region28
        $region27: #{tpu_custom_call.1} parent=23 // pred_region
          %s222 = sand.u32 %s32, 1
          %s223 = sand.u32 %s32, 1
          %s224 = smul.addr %s223, 288
          %s225 = scalar_lea.vmem [#allocation2], %s224
          %s226 = smul.addr %s22, 18
          %s227 = smul.addr %s226, 4
          %s228 = scalar_lea.vmem %s0, %s227
          // Predicated region
          $region29: #{tpu_custom_call.1} parent=27 // pred_check
            _
          $region30: #{tpu_custom_call.1} parent=27 // pred_check_branch
            %230 = sbr.rel (0) target = $region32
          $region31: #{tpu_custom_call.1} parent=27 // pred_region
            // Predicated region
            $region33: #{tpu_custom_call.1} parent=31 // pred_check
              _
            $region34: #{tpu_custom_call.1} parent=31 // pred_check_branch
              %232 = sbr.rel target = $region36
            $region35: #{tpu_custom_call.1} parent=31 // pred_region
              // Predicated region
              $region48: #{tpu_custom_call.1} parent=35 // pred_check
                _
              $region49: #{tpu_custom_call.1} parent=35 // pred_check_branch
                %390 = sbr.rel (0) target = $region51
              $region50: #{tpu_custom_call.1} parent=35 // pred_region
                loop: start=0, step=1, limit=1
                $region52: #{tpu_custom_call.1} parent=50 // loop_pre_header
                  _
                $region53: #{tpu_custom_call.1} parent=50 // loop_header
                  %s392 = sphi 0, %s396
                  %p393 = scmp.ge.s32.totalorder %s392, 1
                  %s397 = sphi %s228, %s228
                  %s398 = sphi %s225, %s225
                $region54: #{tpu_custom_call.1} parent=50 // loop_header_branch
                  %395 = sbr.rel (%p393) target = $region58
                $region55: #{tpu_custom_call.1} parent=50 // loop_body
                  _
                $region56: #{tpu_custom_call.1} parent=50 // loop_footer
                  %s396 = sadd.s32 1, %s392
                $region57: #{tpu_custom_call.1} parent=50 // loop_footer_branch
                  %391 = sbr.rel target = $region53
                $region58: #{tpu_custom_call.1} parent=50 // loop_exit
                  _
                %s400 = ssub.s32 16, 1
                loop: start=0, step=1, limit=1
                $region59: #{tpu_custom_call.1} parent=50 // loop_pre_header
                  _
                $region60: #{tpu_custom_call.1} parent=50 // loop_header
                  %s402 = sphi 0, %s406
                  %p403 = scmp.ge.s32.totalorder %s402, 1
                  %s407 = sphi %s228, %s228
                  %s408 = sphi %s225, %s225
                $region61: #{tpu_custom_call.1} parent=50 // loop_header_branch
                  %405 = sbr.rel (%p403) target = $region65
                $region62: #{tpu_custom_call.1} parent=50 // loop_body
                  %v409 = vld [vmem:[%s407] sm:%s400]
                  %410 = vst [vmem:[%s408] sm:%s400] %v409
                  %v411 = vld [vmem:[%s407 + $0x4] sm:%s400]
                  %412 = vst [vmem:[%s408 + $0x4] sm:%s400] %v411
                  %v413 = vld [vmem:[%s407 + $0x8] sm:%s400]
                  %414 = vst [vmem:[%s408 + $0x8] sm:%s400] %v413
                  %v415 = vld [vmem:[%s407 + $0xc] sm:%s400]
                  %416 = vst [vmem:[%s408 + $0xc] sm:%s400] %v415
                  %v417 = vld [vmem:[%s407 + $0x10] sm:%s400]
                  %418 = vst [vmem:[%s408 + $0x10] sm:%s400] %v417
                  %v419 = vld [vmem:[%s407 + $0x14] sm:%s400]
                  %420 = vst [vmem:[%s408 + $0x14] sm:%s400] %v419
                  %v421 = vld [vmem:[%s407 + $0x18] sm:%s400]
                  %422 = vst [vmem:[%s408 + $0x18] sm:%s400] %v421
                  %v423 = vld [vmem:[%s407 + $0x1c] sm:%s400]
                  %424 = vst [vmem:[%s408 + $0x1c] sm:%s400] %v423
                  %v425 = vld [vmem:[%s407 + $0x20] sm:%s400]
                  %426 = vst [vmem:[%s408 + $0x20] sm:%s400] %v425
                  %v427 = vld [vmem:[%s407 + $0x24] sm:%s400]
                  %428 = vst [vmem:[%s408 + $0x24] sm:%s400] %v427
                  %v429 = vld [vmem:[%s407 + $0x28] sm:%s400]
                  %430 = vst [vmem:[%s408 + $0x28] sm:%s400] %v429
                  %v431 = vld [vmem:[%s407 + $0x2c] sm:%s400]
                  %432 = vst [vmem:[%s408 + $0x2c] sm:%s400] %v431
                  %v433 = vld [vmem:[%s407 + $0x30] sm:%s400]
                  %434 = vst [vmem:[%s408 + $0x30] sm:%s400] %v433
                  %v435 = vld [vmem:[%s407 + $0x34] sm:%s400]
                  %436 = vst [vmem:[%s408 + $0x34] sm:%s400] %v435
                  %v437 = vld [vmem:[%s407 + $0x38] sm:%s400]
                  %438 = vst [vmem:[%s408 + $0x38] sm:%s400] %v437
                  %v439 = vld [vmem:[%s407 + $0x3c] sm:%s400]
                  %440 = vst [vmem:[%s408 + $0x3c] sm:%s400] %v439
                  %v441 = vld [vmem:[%s407 + $0x40] sm:%s400]
                  %442 = vst [vmem:[%s408 + $0x40] sm:%s400] %v441
                  %v443 = vld [vmem:[%s407 + $0x44] sm:%s400]
                  %444 = vst [vmem:[%s408 + $0x44] sm:%s400] %v443
                  %v445 = vld [vmem:[%s407 + $0x90] sm:%s400]
                  %446 = vst [vmem:[%s408 + $0x48] sm:%s400] %v445
                  %v447 = vld [vmem:[%s407 + $0x94] sm:%s400]
                  %448 = vst [vmem:[%s408 + $0x4c] sm:%s400] %v447
                  %v449 = vld [vmem:[%s407 + $0x98] sm:%s400]
                  %450 = vst [vmem:[%s408 + $0x50] sm:%s400] %v449
                  %v451 = vld [vmem:[%s407 + $0x9c] sm:%s400]
                  %452 = vst [vmem:[%s408 + $0x54] sm:%s400] %v451
                  %v453 = vld [vmem:[%s407 + $0xa0] sm:%s400]
                  %454 = vst [vmem:[%s408 + $0x58] sm:%s400] %v453
                  %v455 = vld [vmem:[%s407 + $0xa4] sm:%s400]
                  %456 = vst [vmem:[%s408 + $0x5c] sm:%s400] %v455
                  %v457 = vld [vmem:[%s407 + $0xa8] sm:%s400]
                  %458 = vst [vmem:[%s408 + $0x60] sm:%s400] %v457
                  %v459 = vld [vmem:[%s407 + $0xac] sm:%s400]
                  %460 = vst [vmem:[%s408 + $0x64] sm:%s400] %v459
                  %v461 = vld [vmem:[%s407 + $0xb0] sm:%s400]
                  %462 = vst [vmem:[%s408 + $0x68] sm:%s400] %v461
                  %v463 = vld [vmem:[%s407 + $0xb4] sm:%s400]
                  %464 = vst [vmem:[%s408 + $0x6c] sm:%s400] %v463
                  %v465 = vld [vmem:[%s407 + $0xb8] sm:%s400]
                  %466 = vst [vmem:[%s408 + $0x70] sm:%s400] %v465
                  %v467 = vld [vmem:[%s407 + $0xbc] sm:%s400]
                  %468 = vst [vmem:[%s408 + $0x74] sm:%s400] %v467
                  %v469 = vld [vmem:[%s407 + $0xc0] sm:%s400]
                  %470 = vst [vmem:[%s408 + $0x78] sm:%s400] %v469
                  %v471 = vld [vmem:[%s407 + $0xc4] sm:%s400]
                  %472 = vst [vmem:[%s408 + $0x7c] sm:%s400] %v471
                  %v473 = vld [vmem:[%s407 + $0xc8] sm:%s400]
                  %474 = vst [vmem:[%s408 + $0x80] sm:%s400] %v473
                  %v475 = vld [vmem:[%s407 + $0xcc] sm:%s400]
                  %476 = vst [vmem:[%s408 + $0x84] sm:%s400] %v475
                  %v477 = vld [vmem:[%s407 + $0xd0] sm:%s400]
                  %478 = vst [vmem:[%s408 + $0x88] sm:%s400] %v477
                  %v479 = vld [vmem:[%s407 + $0xd4] sm:%s400]
                  %480 = vst [vmem:[%s408 + $0x8c] sm:%s400] %v479
                  %v481 = vld [vmem:[%s407 + $0x120] sm:%s400]
                  %482 = vst [vmem:[%s408 + $0x90] sm:%s400] %v481
                  %v483 = vld [vmem:[%s407 + $0x124] sm:%s400]
                  %484 = vst [vmem:[%s408 + $0x94] sm:%s400] %v483
                  %v485 = vld [vmem:[%s407 + $0x128] sm:%s400]
                  %486 = vst [vmem:[%s408 + $0x98] sm:%s400] %v485
                  %v487 = vld [vmem:[%s407 + $0x12c] sm:%s400]
                  %488 = vst [vmem:[%s408 + $0x9c] sm:%s400] %v487
                  %v489 = vld [vmem:[%s407 + $0x130] sm:%s400]
                  %490 = vst [vmem:[%s408 + $0xa0] sm:%s400] %v489
                  %v491 = vld [vmem:[%s407 + $0x134] sm:%s400]
                  %492 = vst [vmem:[%s408 + $0xa4] sm:%s400] %v491
                  %v493 = vld [vmem:[%s407 + $0x138] sm:%s400]
                  %494 = vst [vmem:[%s408 + $0xa8] sm:%s400] %v493
                  %v495 = vld [vmem:[%s407 + $0x13c] sm:%s400]
                  %496 = vst [vmem:[%s408 + $0xac] sm:%s400] %v495
                  %v497 = vld [vmem:[%s407 + $0x140] sm:%s400]
                  %498 = vst [vmem:[%s408 + $0xb0] sm:%s400] %v497
                  %v499 = vld [vmem:[%s407 + $0x144] sm:%s400]
                  %500 = vst [vmem:[%s408 + $0xb4] sm:%s400] %v499
                  %v501 = vld [vmem:[%s407 + $0x148] sm:%s400]
                  %502 = vst [vmem:[%s408 + $0xb8] sm:%s400] %v501
                  %v503 = vld [vmem:[%s407 + $0x14c] sm:%s400]
                  %504 = vst [vmem:[%s408 + $0xbc] sm:%s400] %v503
                  %v505 = vld [vmem:[%s407 + $0x150] sm:%s400]
                  %506 = vst [vmem:[%s408 + $0xc0] sm:%s400] %v505
                  %v507 = vld [vmem:[%s407 + $0x154] sm:%s400]
                  %508 = vst [vmem:[%s408 + $0xc4] sm:%s400] %v507
                  %v509 = vld [vmem:[%s407 + $0x158] sm:%s400]
                  %510 = vst [vmem:[%s408 + $0xc8] sm:%s400] %v509
                  %v511 = vld [vmem:[%s407 + $0x15c] sm:%s400]
                  %512 = vst [vmem:[%s408 + $0xcc] sm:%s400] %v511
                  %v513 = vld [vmem:[%s407 + $0x160] sm:%s400]
                  %514 = vst [vmem:[%s408 + $0xd0] sm:%s400] %v513
                  %v515 = vld [vmem:[%s407 + $0x164] sm:%s400]
                  %516 = vst [vmem:[%s408 + $0xd4] sm:%s400] %v515
                  %v517 = vld [vmem:[%s407 + $0x1b0] sm:%s400]
                  %518 = vst [vmem:[%s408 + $0xd8] sm:%s400] %v517
                  %v519 = vld [vmem:[%s407 + $0x1b4] sm:%s400]
                  %520 = vst [vmem:[%s408 + $0xdc] sm:%s400] %v519
                  %v521 = vld [vmem:[%s407 + $0x1b8] sm:%s400]
                  %522 = vst [vmem:[%s408 + $0xe0] sm:%s400] %v521
                  %v523 = vld [vmem:[%s407 + $0x1bc] sm:%s400]
                  %524 = vst [vmem:[%s408 + $0xe4] sm:%s400] %v523
                  %v525 = vld [vmem:[%s407 + $0x1c0] sm:%s400]
                  %526 = vst [vmem:[%s408 + $0xe8] sm:%s400] %v525
                  %v527 = vld [vmem:[%s407 + $0x1c4] sm:%s400]
                  %528 = vst [vmem:[%s408 + $0xec] sm:%s400] %v527
                  %v529 = vld [vmem:[%s407 + $0x1c8] sm:%s400]
                  %530 = vst [vmem:[%s408 + $0xf0] sm:%s400] %v529
                  %v531 = vld [vmem:[%s407 + $0x1cc] sm:%s400]
                  %532 = vst [vmem:[%s408 + $0xf4] sm:%s400] %v531
                  %v533 = vld [vmem:[%s407 + $0x1d0] sm:%s400]
                  %534 = vst [vmem:[%s408 + $0xf8] sm:%s400] %v533
                  %v535 = vld [vmem:[%s407 + $0x1d4] sm:%s400]
                  %536 = vst [vmem:[%s408 + $0xfc] sm:%s400] %v535
                  %v537 = vld [vmem:[%s407 + $0x1d8] sm:%s400]
                  %538 = vst [vmem:[%s408 + $0x100] sm:%s400] %v537
                  %v539 = vld [vmem:[%s407 + $0x1dc] sm:%s400]
                  %540 = vst [vmem:[%s408 + $0x104] sm:%s400] %v539
                  %v541 = vld [vmem:[%s407 + $0x1e0] sm:%s400]
                  %542 = vst [vmem:[%s408 + $0x108] sm:%s400] %v541
                  %v543 = vld [vmem:[%s407 + $0x1e4] sm:%s400]
                  %544 = vst [vmem:[%s408 + $0x10c] sm:%s400] %v543
                  %v545 = vld [vmem:[%s407 + $0x1e8] sm:%s400]
                  %546 = vst [vmem:[%s408 + $0x110] sm:%s400] %v545
                  %v547 = vld [vmem:[%s407 + $0x1ec] sm:%s400]
                  %548 = vst [vmem:[%s408 + $0x114] sm:%s400] %v547
                  %v549 = vld [vmem:[%s407 + $0x1f0] sm:%s400]
                  %550 = vst [vmem:[%s408 + $0x118] sm:%s400] %v549
                  %v551 = vld [vmem:[%s407 + $0x1f4] sm:%s400]
                  %552 = vst [vmem:[%s408 + $0x11c] sm:%s400] %v551
                $region63: #{tpu_custom_call.1} parent=50 // loop_footer
                  %s406 = sadd.s32 1, %s402
                $region64: #{tpu_custom_call.1} parent=50 // loop_footer_branch
                  %401 = sbr.rel target = $region60
                $region65: #{tpu_custom_call.1} parent=50 // loop_exit
                  _
              $region51: #{tpu_custom_call.1} parent=35 // pred_fallthru
                _
            $region36: #{tpu_custom_call.1} parent=31 // pred_fallthru
              _
            // Predicated region
            $region37: #{tpu_custom_call.1} parent=31 // pred_check
              _
            $region38: #{tpu_custom_call.1} parent=31 // pred_check_branch
              %234 = sbr.rel (0) target = $region40
            $region39: #{tpu_custom_call.1} parent=31 // pred_region
              %s236 = ssub.s32 16, 1
              loop: start=0, step=1, limit=1
              $region41: #{tpu_custom_call.1} parent=39 // loop_pre_header
                _
              $region42: #{tpu_custom_call.1} parent=39 // loop_header
                %s238 = sphi 0, %s242
                %p239 = scmp.ge.s32.totalorder %s238, 1
                %s243 = sphi %s228, %s228
                %s244 = sphi %s225, %s225
              $region43: #{tpu_custom_call.1} parent=39 // loop_header_branch
                %241 = sbr.rel (%p239) target = $region47
              $region44: #{tpu_custom_call.1} parent=39 // loop_body
                %v245 = vld [vmem:[%s243] sm:%s236]
                %246 = vst [vmem:[%s244] sm:%s236] %v245
                %v247 = vld [vmem:[%s243 + $0x4] sm:%s236]
                %248 = vst [vmem:[%s244 + $0x4] sm:%s236] %v247
                %v249 = vld [vmem:[%s243 + $0x8] sm:%s236]
                %250 = vst [vmem:[%s244 + $0x8] sm:%s236] %v249
                %v251 = vld [vmem:[%s243 + $0xc] sm:%s236]
                %252 = vst [vmem:[%s244 + $0xc] sm:%s236] %v251
                %v253 = vld [vmem:[%s243 + $0x10] sm:%s236]
                %254 = vst [vmem:[%s244 + $0x10] sm:%s236] %v253
                %v255 = vld [vmem:[%s243 + $0x14] sm:%s236]
                %256 = vst [vmem:[%s244 + $0x14] sm:%s236] %v255
                %v257 = vld [vmem:[%s243 + $0x18] sm:%s236]
                %258 = vst [vmem:[%s244 + $0x18] sm:%s236] %v257
                %v259 = vld [vmem:[%s243 + $0x1c] sm:%s236]
                %260 = vst [vmem:[%s244 + $0x1c] sm:%s236] %v259
                %v261 = vld [vmem:[%s243 + $0x20] sm:%s236]
                %262 = vst [vmem:[%s244 + $0x20] sm:%s236] %v261
                %v263 = vld [vmem:[%s243 + $0x24] sm:%s236]
                %264 = vst [vmem:[%s244 + $0x24] sm:%s236] %v263
                %v265 = vld [vmem:[%s243 + $0x28] sm:%s236]
                %266 = vst [vmem:[%s244 + $0x28] sm:%s236] %v265
                %v267 = vld [vmem:[%s243 + $0x2c] sm:%s236]
                %268 = vst [vmem:[%s244 + $0x2c] sm:%s236] %v267
                %v269 = vld [vmem:[%s243 + $0x30] sm:%s236]
                %270 = vst [vmem:[%s244 + $0x30] sm:%s236] %v269
                %v271 = vld [vmem:[%s243 + $0x34] sm:%s236]
                %272 = vst [vmem:[%s244 + $0x34] sm:%s236] %v271
                %v273 = vld [vmem:[%s243 + $0x38] sm:%s236]
                %274 = vst [vmem:[%s244 + $0x38] sm:%s236] %v273
                %v275 = vld [vmem:[%s243 + $0x3c] sm:%s236]
                %276 = vst [vmem:[%s244 + $0x3c] sm:%s236] %v275
                %v277 = vld [vmem:[%s243 + $0x40] sm:%s236]
                %278 = vst [vmem:[%s244 + $0x40] sm:%s236] %v277
                %v279 = vld [vmem:[%s243 + $0x44] sm:%s236]
                %280 = vst [vmem:[%s244 + $0x44] sm:%s236] %v279
                %v281 = vld [vmem:[%s243 + $0x90] sm:%s236]
                %282 = vst [vmem:[%s244 + $0x48] sm:%s236] %v281
                %v283 = vld [vmem:[%s243 + $0x94] sm:%s236]
                %284 = vst [vmem:[%s244 + $0x4c] sm:%s236] %v283
                %v285 = vld [vmem:[%s243 + $0x98] sm:%s236]
                %286 = vst [vmem:[%s244 + $0x50] sm:%s236] %v285
                %v287 = vld [vmem:[%s243 + $0x9c] sm:%s236]
                %288 = vst [vmem:[%s244 + $0x54] sm:%s236] %v287
                %v289 = vld [vmem:[%s243 + $0xa0] sm:%s236]
                %290 = vst [vmem:[%s244 + $0x58] sm:%s236] %v289
                %v291 = vld [vmem:[%s243 + $0xa4] sm:%s236]
                %292 = vst [vmem:[%s244 + $0x5c] sm:%s236] %v291
                %v293 = vld [vmem:[%s243 + $0xa8] sm:%s236]
                %294 = vst [vmem:[%s244 + $0x60] sm:%s236] %v293
                %v295 = vld [vmem:[%s243 + $0xac] sm:%s236]
                %296 = vst [vmem:[%s244 + $0x64] sm:%s236] %v295
                %v297 = vld [vmem:[%s243 + $0xb0] sm:%s236]
                %298 = vst [vmem:[%s244 + $0x68] sm:%s236] %v297
                %v299 = vld [vmem:[%s243 + $0xb4] sm:%s236]
                %300 = vst [vmem:[%s244 + $0x6c] sm:%s236] %v299
                %v301 = vld [vmem:[%s243 + $0xb8] sm:%s236]
                %302 = vst [vmem:[%s244 + $0x70] sm:%s236] %v301
                %v303 = vld [vmem:[%s243 + $0xbc] sm:%s236]
                %304 = vst [vmem:[%s244 + $0x74] sm:%s236] %v303
                %v305 = vld [vmem:[%s243 + $0xc0] sm:%s236]
                %306 = vst [vmem:[%s244 + $0x78] sm:%s236] %v305
                %v307 = vld [vmem:[%s243 + $0xc4] sm:%s236]
                %308 = vst [vmem:[%s244 + $0x7c] sm:%s236] %v307
                %v309 = vld [vmem:[%s243 + $0xc8] sm:%s236]
                %310 = vst [vmem:[%s244 + $0x80] sm:%s236] %v309
                %v311 = vld [vmem:[%s243 + $0xcc] sm:%s236]
                %312 = vst [vmem:[%s244 + $0x84] sm:%s236] %v311
                %v313 = vld [vmem:[%s243 + $0xd0] sm:%s236]
                %314 = vst [vmem:[%s244 + $0x88] sm:%s236] %v313
                %v315 = vld [vmem:[%s243 + $0xd4] sm:%s236]
                %316 = vst [vmem:[%s244 + $0x8c] sm:%s236] %v315
                %v317 = vld [vmem:[%s243 + $0x120] sm:%s236]
                %318 = vst [vmem:[%s244 + $0x90] sm:%s236] %v317
                %v319 = vld [vmem:[%s243 + $0x124] sm:%s236]
                %320 = vst [vmem:[%s244 + $0x94] sm:%s236] %v319
                %v321 = vld [vmem:[%s243 + $0x128] sm:%s236]
                %322 = vst [vmem:[%s244 + $0x98] sm:%s236] %v321
                %v323 = vld [vmem:[%s243 + $0x12c] sm:%s236]
                %324 = vst [vmem:[%s244 + $0x9c] sm:%s236] %v323
                %v325 = vld [vmem:[%s243 + $0x130] sm:%s236]
                %326 = vst [vmem:[%s244 + $0xa0] sm:%s236] %v325
                %v327 = vld [vmem:[%s243 + $0x134] sm:%s236]
                %328 = vst [vmem:[%s244 + $0xa4] sm:%s236] %v327
                %v329 = vld [vmem:[%s243 + $0x138] sm:%s236]
                %330 = vst [vmem:[%s244 + $0xa8] sm:%s236] %v329
                %v331 = vld [vmem:[%s243 + $0x13c] sm:%s236]
                %332 = vst [vmem:[%s244 + $0xac] sm:%s236] %v331
                %v333 = vld [vmem:[%s243 + $0x140] sm:%s236]
                %334 = vst [vmem:[%s244 + $0xb0] sm:%s236] %v333
                %v335 = vld [vmem:[%s243 + $0x144] sm:%s236]
                %336 = vst [vmem:[%s244 + $0xb4] sm:%s236] %v335
                %v337 = vld [vmem:[%s243 + $0x148] sm:%s236]
                %338 = vst [vmem:[%s244 + $0xb8] sm:%s236] %v337
                %v339 = vld [vmem:[%s243 + $0x14c] sm:%s236]
                %340 = vst [vmem:[%s244 + $0xbc] sm:%s236] %v339
                %v341 = vld [vmem:[%s243 + $0x150] sm:%s236]
                %342 = vst [vmem:[%s244 + $0xc0] sm:%s236] %v341
                %v343 = vld [vmem:[%s243 + $0x154] sm:%s236]
                %344 = vst [vmem:[%s244 + $0xc4] sm:%s236] %v343
                %v345 = vld [vmem:[%s243 + $0x158] sm:%s236]
                %346 = vst [vmem:[%s244 + $0xc8] sm:%s236] %v345
                %v347 = vld [vmem:[%s243 + $0x15c] sm:%s236]
                %348 = vst [vmem:[%s244 + $0xcc] sm:%s236] %v347
                %v349 = vld [vmem:[%s243 + $0x160] sm:%s236]
                %350 = vst [vmem:[%s244 + $0xd0] sm:%s236] %v349
                %v351 = vld [vmem:[%s243 + $0x164] sm:%s236]
                %352 = vst [vmem:[%s244 + $0xd4] sm:%s236] %v351
                %v353 = vld [vmem:[%s243 + $0x1b0] sm:%s236]
                %354 = vst [vmem:[%s244 + $0xd8] sm:%s236] %v353
                %v355 = vld [vmem:[%s243 + $0x1b4] sm:%s236]
                %356 = vst [vmem:[%s244 + $0xdc] sm:%s236] %v355
                %v357 = vld [vmem:[%s243 + $0x1b8] sm:%s236]
                %358 = vst [vmem:[%s244 + $0xe0] sm:%s236] %v357
                %v359 = vld [vmem:[%s243 + $0x1bc] sm:%s236]
                %360 = vst [vmem:[%s244 + $0xe4] sm:%s236] %v359
                %v361 = vld [vmem:[%s243 + $0x1c0] sm:%s236]
                %362 = vst [vmem:[%s244 + $0xe8] sm:%s236] %v361
                %v363 = vld [vmem:[%s243 + $0x1c4] sm:%s236]
                %364 = vst [vmem:[%s244 + $0xec] sm:%s236] %v363
                %v365 = vld [vmem:[%s243 + $0x1c8] sm:%s236]
                %366 = vst [vmem:[%s244 + $0xf0] sm:%s236] %v365
                %v367 = vld [vmem:[%s243 + $0x1cc] sm:%s236]
                %368 = vst [vmem:[%s244 + $0xf4] sm:%s236] %v367
                %v369 = vld [vmem:[%s243 + $0x1d0] sm:%s236]
                %370 = vst [vmem:[%s244 + $0xf8] sm:%s236] %v369
                %v371 = vld [vmem:[%s243 + $0x1d4] sm:%s236]
                %372 = vst [vmem:[%s244 + $0xfc] sm:%s236] %v371
                %v373 = vld [vmem:[%s243 + $0x1d8] sm:%s236]
                %374 = vst [vmem:[%s244 + $0x100] sm:%s236] %v373
                %v375 = vld [vmem:[%s243 + $0x1dc] sm:%s236]
                %376 = vst [vmem:[%s244 + $0x104] sm:%s236] %v375
                %v377 = vld [vmem:[%s243 + $0x1e0] sm:%s236]
                %378 = vst [vmem:[%s244 + $0x108] sm:%s236] %v377
                %v379 = vld [vmem:[%s243 + $0x1e4] sm:%s236]
                %380 = vst [vmem:[%s244 + $0x10c] sm:%s236] %v379
                %v381 = vld [vmem:[%s243 + $0x1e8] sm:%s236]
                %382 = vst [vmem:[%s244 + $0x110] sm:%s236] %v381
                %v383 = vld [vmem:[%s243 + $0x1ec] sm:%s236]
                %384 = vst [vmem:[%s244 + $0x114] sm:%s236] %v383
                %v385 = vld [vmem:[%s243 + $0x1f0] sm:%s236]
                %386 = vst [vmem:[%s244 + $0x118] sm:%s236] %v385
                %v387 = vld [vmem:[%s243 + $0x1f4] sm:%s236]
                %388 = vst [vmem:[%s244 + $0x11c] sm:%s236] %v387
              $region45: #{tpu_custom_call.1} parent=39 // loop_footer
                %s242 = sadd.s32 1, %s238
              $region46: #{tpu_custom_call.1} parent=39 // loop_footer_branch
                %237 = sbr.rel target = $region42
              $region47: #{tpu_custom_call.1} parent=39 // loop_exit
                _
            $region40: #{tpu_custom_call.1} parent=31 // pred_fallthru
              _
          $region32: #{tpu_custom_call.1} parent=27 // pred_fallthru
            _
          %553 = vnop
        $region28: #{tpu_custom_call.1} parent=23 // pred_fallthru
          _
      $region24: #{tpu_custom_call.1} parent=5 // pred_fallthru
        _
      %p554 = scmp.le.s32.totalorder 1, %s22
      %p555 = scmp.lt.s32.totalorder %s22, 3
      %p556 = pnand %p554, %p555
      %p557 = pneg %p556
      // Predicated region
      $region66: #{tpu_custom_call.1} parent=5 // pred_check
        _
      $region67: #{tpu_custom_call.1} parent=5 // pred_check_branch
        %559 = sbr.rel (%p556) target = $region69
      $region68: #{tpu_custom_call.1} parent=5 // pred_region
        %s560 = ssub.s32 %s22, 1
        %s561 = sand.u32 %s35, 1
        %s562 = sand.u32 %s35, 1
        %s563 = smul.addr %s562, 288
        %s564 = scalar_lea.vmem [#allocation2], %s563
        // Predicated region
        $region70: #{tpu_custom_call.1} parent=68 // pred_check
          %p565 = pneg %p48
        $region71: #{tpu_custom_call.1} parent=68 // pred_check_branch
          %567 = sbr.rel (%p565) target = $region73
        $region72: #{tpu_custom_call.1} parent=68 // pred_region
          _
        $region73: #{tpu_custom_call.1} parent=68 // pred_fallthru
          _
        %s568 = sand.u32 %s35, 1
        %s569 = sand.u32 %s35, 1
        %s570 = smul.addr %s569, 288
        %s571 = scalar_lea.vmem [#allocation2], %s570
        %p572 = pneg %p48
        %p573 = pneg %p45
        %p574 = pneg %p69
        %p575 = pneg %p66
        %p576 = pneg %p90
        %p577 = pneg %p87
        %p578 = pneg %p116
        %p579 = pneg %p113
        %s580 = sand.u32 %s103, 1
        %s581 = scalar_lea.sflag [#allocation4], %s580
        %s582 = sand.u32 %s103, 1
        %s583 = smul.addr %s582, 32
        %s584 = scalar_lea.vmem [#allocation3], %s583
        %p585 = pneg %p142
        %p586 = pneg %p139
        %s587 = sand.u32 %s27, 1
        %s588 = scalar_lea.sflag [#allocation6], %s587
        %s589 = sand.u32 %s129, 1
        %s590 = smul.addr %s589, 2
        %s591 = scalar_lea.vmem [#allocation5], %s590
        %p592 = pneg %p168
        %p593 = pneg %p165
        %s594 = sand.u32 %s27, 1
        %s595 = scalar_lea.sflag [#allocation6], %s594
        %s596 = sand.u32 %s155, 1
        %s597 = smul.addr %s596, 32
        %s598 = scalar_lea.vmem [#allocation7], %s597
        %p599 = pneg %p194
        %p600 = pneg %p191
        %s601 = sand.u32 %s181, 1
        %s602 = scalar_lea.sflag [#allocation9], %s601
        %s603 = sand.u32 %s181, 1
        %s604 = smul.addr %s603, 2
        %s605 = scalar_lea.vmem [#allocation8], %s604
        %v607 = vld [vmem:[%s564] sm:$0xf]
        %v608 = vld [vmem:[%s564 + $0x8] sm:$0xf]
        %v609 = vld [vmem:[%s564 + $0x10] sm:$0xf]
        %v610 = vld [vmem:[%s564 + $0x18] sm:$0xf]
        %v611 = vld [vmem:[%s564 + $0x20] sm:$0xf]
        %v612 = vld [vmem:[%s564 + $0x28] sm:$0xf]
        %v613 = vld [vmem:[%s564 + $0x30] sm:$0xf]
        %v614 = vld [vmem:[%s564 + $0x38] sm:$0xf]
        %s615 = scalar_lea.vmem %s564, 72 [#allocation2]
        %v616 = vld [vmem:[%s615] sm:$0xf]
        %v617 = vld [vmem:[%s615 + $0x8] sm:$0xf]
        %v618 = vld [vmem:[%s615 + $0x10] sm:$0xf]
        %v619 = vld [vmem:[%s615 + $0x18] sm:$0xf]
        %v620 = vld [vmem:[%s615 + $0x20] sm:$0xf]
        %v621 = vld [vmem:[%s615 + $0x28] sm:$0xf]
        %v622 = vld [vmem:[%s615 + $0x30] sm:$0xf]
        %v623 = vld [vmem:[%s615 + $0x38] sm:$0xf]
        %v624 = vld [vmem:[%s564 + $0x4] sm:$0x1]
        %v625 = vld [vmem:[%s564 + $0xc] sm:$0x1]
        %v626 = vld [vmem:[%s564 + $0x14] sm:$0x1]
        %v627 = vld [vmem:[%s564 + $0x1c] sm:$0x1]
        %v628 = vld [vmem:[%s564 + $0x24] sm:$0x1]
        %v629 = vld [vmem:[%s564 + $0x2c] sm:$0x1]
        %v630 = vld [vmem:[%s564 + $0x34] sm:$0x1]
        %v631 = vld [vmem:[%s564 + $0x3c] sm:$0x1]
        %s632 = scalar_lea.vmem %s564, 144 [#allocation2]
        %v633 = vld [vmem:[%s632] sm:$0xf]
        %v634 = vld [vmem:[%s632 + $0x8] sm:$0xf]
        %v635 = vld [vmem:[%s632 + $0x10] sm:$0xf]
        %v636 = vld [vmem:[%s632 + $0x18] sm:$0xf]
        %v637 = vld [vmem:[%s632 + $0x20] sm:$0xf]
        %v638 = vld [vmem:[%s632 + $0x28] sm:$0xf]
        %v639 = vld [vmem:[%s632 + $0x30] sm:$0xf]
        %v640 = vld [vmem:[%s632 + $0x38] sm:$0xf]
        %s641 = scalar_lea.vmem %s564, 216 [#allocation2]
        %v642 = vld [vmem:[%s641] sm:$0xf]
        %v643 = vld [vmem:[%s641 + $0x8] sm:$0xf]
        %v644 = vld [vmem:[%s641 + $0x10] sm:$0xf]
        %v645 = vld [vmem:[%s641 + $0x18] sm:$0xf]
        %v646 = vld [vmem:[%s641 + $0x20] sm:$0xf]
        %v647 = vld [vmem:[%s641 + $0x28] sm:$0xf]
        %v648 = vld [vmem:[%s641 + $0x30] sm:$0xf]
        %v649 = vld [vmem:[%s641 + $0x38] sm:$0xf]
        %v650 = vld [vmem:[%s632 + $0x4] sm:$0x1]
        %v651 = vld [vmem:[%s632 + $0xc] sm:$0x1]
        %v652 = vld [vmem:[%s632 + $0x14] sm:$0x1]
        %v653 = vld [vmem:[%s632 + $0x1c] sm:$0x1]
        %v654 = vld [vmem:[%s632 + $0x24] sm:$0x1]
        %v655 = vld [vmem:[%s632 + $0x2c] sm:$0x1]
        %v656 = vld [vmem:[%s632 + $0x34] sm:$0x1]
        %v657 = vld [vmem:[%s632 + $0x3c] sm:$0x1]
        %s658 = scalar_lea.vmem %s564, 8 [#allocation2]
        %v659 = vld [vmem:[%s658] sm:$0xf]
        %v660 = vld [vmem:[%s658 + $0x8] sm:$0xf]
        %v661 = vld [vmem:[%s658 + $0x10] sm:$0xf]
        %v662 = vld [vmem:[%s658 + $0x18] sm:$0xf]
        %v663 = vld [vmem:[%s658 + $0x20] sm:$0xf]
        %v664 = vld [vmem:[%s658 + $0x28] sm:$0xf]
        %v665 = vld [vmem:[%s658 + $0x30] sm:$0xf]
        %v666 = vld [vmem:[%s658 + $0x38] sm:$0xf]
        %s667 = scalar_lea.vmem %s564, 80 [#allocation2]
        %v668 = vld [vmem:[%s667] sm:$0xf]
        %v669 = vld [vmem:[%s667 + $0x8] sm:$0xf]
        %v670 = vld [vmem:[%s667 + $0x10] sm:$0xf]
        %v671 = vld [vmem:[%s667 + $0x18] sm:$0xf]
        %v672 = vld [vmem:[%s667 + $0x20] sm:$0xf]
        %v673 = vld [vmem:[%s667 + $0x28] sm:$0xf]
        %v674 = vld [vmem:[%s667 + $0x30] sm:$0xf]
        %v675 = vld [vmem:[%s667 + $0x38] sm:$0xf]
        %v676 = vld [vmem:[%s658 + $0x4] sm:$0x1]
        %v677 = vld [vmem:[%s658 + $0xc] sm:$0x1]
        %v678 = vld [vmem:[%s658 + $0x14] sm:$0x1]
        %v679 = vld [vmem:[%s658 + $0x1c] sm:$0x1]
        %v680 = vld [vmem:[%s658 + $0x24] sm:$0x1]
        %v681 = vld [vmem:[%s658 + $0x2c] sm:$0x1]
        %v682 = vld [vmem:[%s658 + $0x34] sm:$0x1]
        %v683 = vld [vmem:[%s658 + $0x3c] sm:$0x1]
        %v692 = vunpack.c.l.b16 %v616
        %v693 = vunpack.c.l.b16 %v617
        %v694 = vunpack.c.l.b16 %v618
        %v695 = vunpack.c.l.b16 %v619
        %v696 = vunpack.c.l.b16 %v620
        %v697 = vunpack.c.l.b16 %v621
        %v698 = vunpack.c.l.b16 %v622
        %v699 = vunpack.c.l.b16 %v623
        %v700 = vpack.c.b16 %v692, %v692
        %v701 = vpack.c.b16 %v693, %v693
        %v702 = vpack.c.b16 %v694, %v694
        %v703 = vpack.c.b16 %v695, %v695
        %v704 = vpack.c.b16 %v696, %v696
        %v705 = vpack.c.b16 %v697, %v697
        %v706 = vpack.c.b16 %v698, %v698
        %v707 = vpack.c.b16 %v699, %v699
        %708 = vrot.lane.b32.xlu0 %v700, 4
        %v709 = vpop.permute.xlu0 %708
        %710 = vrot.lane.b32.xlu0 %v701, 4
        %v711 = vpop.permute.xlu0 %710
        %712 = vrot.lane.b32.xlu0 %v702, 4
        %v713 = vpop.permute.xlu0 %712
        %714 = vrot.lane.b32.xlu0 %v703, 4
        %v715 = vpop.permute.xlu0 %714
        %716 = vrot.lane.b32.xlu0 %v704, 4
        %v717 = vpop.permute.xlu0 %716
        %718 = vrot.lane.b32.xlu0 %v705, 4
        %v719 = vpop.permute.xlu0 %718
        %720 = vrot.lane.b32.xlu0 %v706, 4
        %v721 = vpop.permute.xlu0 %720
        %722 = vrot.lane.b32.xlu0 %v707, 4
        %v723 = vpop.permute.xlu0 %722
        %v740 = vunpack.c.l.b16 %v607
        %v741 = vunpack.c.l.b16 %v624
        %v742 = vunpack.c.l.b16 %v608
        %v743 = vunpack.c.l.b16 %v625
        %v744 = vunpack.c.l.b16 %v609
        %v745 = vunpack.c.l.b16 %v626
        %v746 = vunpack.c.l.b16 %v610
        %v747 = vunpack.c.l.b16 %v627
        %v748 = vunpack.c.l.b16 %v611
        %v749 = vunpack.c.l.b16 %v628
        %v750 = vunpack.c.l.b16 %v612
        %v751 = vunpack.c.l.b16 %v629
        %v752 = vunpack.c.l.b16 %v613
        %v753 = vunpack.c.l.b16 %v630
        %v754 = vunpack.c.l.b16 %v614
        %v755 = vunpack.c.l.b16 %v631
        %v756 = vpack.c.b16 %v741, %v740
        %v757 = vpack.c.b16 %v743, %v742
        %v758 = vpack.c.b16 %v745, %v744
        %v759 = vpack.c.b16 %v747, %v746
        %v760 = vpack.c.b16 %v749, %v748
        %v761 = vpack.c.b16 %v751, %v750
        %v762 = vpack.c.b16 %v753, %v752
        %v763 = vpack.c.b16 %v755, %v754
        %v765 = vshrl.u32 %v756, 16
        %v767 = vshll.u32 %v756, 16
        %v769 = vrot.slane %v767, 1
        %v770 = vor.u32 %v765, %v769
        %v772 = vshrl.u32 %v757, 16
        %v774 = vshll.u32 %v757, 16
        %v776 = vrot.slane %v774, 1
        %v777 = vor.u32 %v772, %v776
        %v779 = vshrl.u32 %v758, 16
        %v781 = vshll.u32 %v758, 16
        %v783 = vrot.slane %v781, 1
        %v784 = vor.u32 %v779, %v783
        %v786 = vshrl.u32 %v759, 16
        %v788 = vshll.u32 %v759, 16
        %v790 = vrot.slane %v788, 1
        %v791 = vor.u32 %v786, %v790
        %v793 = vshrl.u32 %v760, 16
        %v795 = vshll.u32 %v760, 16
        %v797 = vrot.slane %v795, 1
        %v798 = vor.u32 %v793, %v797
        %v800 = vshrl.u32 %v761, 16
        %v802 = vshll.u32 %v761, 16
        %v804 = vrot.slane %v802, 1
        %v805 = vor.u32 %v800, %v804
        %v807 = vshrl.u32 %v762, 16
        %v809 = vshll.u32 %v762, 16
        %v811 = vrot.slane %v809, 1
        %v812 = vor.u32 %v807, %v811
        %v814 = vshrl.u32 %v763, 16
        %v816 = vshll.u32 %v763, 16
        %v818 = vrot.slane %v816, 1
        %v819 = vor.u32 %v814, %v818
        %820 = vrot.lane.b32.xlu0 %v770, 8
        %v821 = vpop.permute.xlu0 %820
        %822 = vrot.lane.b32.xlu0 %v777, 8
        %v823 = vpop.permute.xlu0 %822
        %824 = vrot.lane.b32.xlu0 %v784, 8
        %v825 = vpop.permute.xlu0 %824
        %826 = vrot.lane.b32.xlu0 %v791, 8
        %v827 = vpop.permute.xlu0 %826
        %828 = vrot.lane.b32.xlu0 %v798, 8
        %v829 = vpop.permute.xlu0 %828
        %830 = vrot.lane.b32.xlu0 %v805, 8
        %v831 = vpop.permute.xlu0 %830
        %832 = vrot.lane.b32.xlu0 %v812, 8
        %v833 = vpop.permute.xlu0 %832
        %834 = vrot.lane.b32.xlu0 %v819, 8
        %v835 = vpop.permute.xlu0 %834
        %v844 = vunpack.c.l.b16 %v633
        %v845 = vunpack.c.l.b16 %v634
        %v846 = vunpack.c.l.b16 %v635
        %v847 = vunpack.c.l.b16 %v636
        %v848 = vunpack.c.l.b16 %v637
        %v849 = vunpack.c.l.b16 %v638
        %v850 = vunpack.c.l.b16 %v639
        %v851 = vunpack.c.l.b16 %v640
        %v852 = vpack.c.b16 %v844, %v844
        %v853 = vpack.c.b16 %v845, %v845
        %v854 = vpack.c.b16 %v846, %v846
        %v855 = vpack.c.b16 %v847, %v847
        %v856 = vpack.c.b16 %v848, %v848
        %v857 = vpack.c.b16 %v849, %v849
        %v858 = vpack.c.b16 %v850, %v850
        %v859 = vpack.c.b16 %v851, %v851
        %860 = vrot.lane.b32.xlu0 %v852, 12
        %v861 = vpop.permute.xlu0 %860
        %862 = vrot.lane.b32.xlu0 %v853, 12
        %v863 = vpop.permute.xlu0 %862
        %864 = vrot.lane.b32.xlu0 %v854, 12
        %v865 = vpop.permute.xlu0 %864
        %866 = vrot.lane.b32.xlu0 %v855, 12
        %v867 = vpop.permute.xlu0 %866
        %868 = vrot.lane.b32.xlu0 %v856, 12
        %v869 = vpop.permute.xlu0 %868
        %870 = vrot.lane.b32.xlu0 %v857, 12
        %v871 = vpop.permute.xlu0 %870
        %872 = vrot.lane.b32.xlu0 %v858, 12
        %v873 = vpop.permute.xlu0 %872
        %874 = vrot.lane.b32.xlu0 %v859, 12
        %v875 = vpop.permute.xlu0 %874
        %v884 = vunpack.c.l.b16 %v642
        %v885 = vunpack.c.l.b16 %v643
        %v886 = vunpack.c.l.b16 %v644
        %v887 = vunpack.c.l.b16 %v645
        %v888 = vunpack.c.l.b16 %v646
        %v889 = vunpack.c.l.b16 %v647
        %v890 = vunpack.c.l.b16 %v648
        %v891 = vunpack.c.l.b16 %v649
        %v892 = vpack.c.b16 %v884, %v884
        %v893 = vpack.c.b16 %v885, %v885
        %v894 = vpack.c.b16 %v886, %v886
        %v895 = vpack.c.b16 %v887, %v887
        %v896 = vpack.c.b16 %v888, %v888
        %v897 = vpack.c.b16 %v889, %v889
        %v898 = vpack.c.b16 %v890, %v890
        %v899 = vpack.c.b16 %v891, %v891
        %900 = vrot.lane.b32.xlu0 %v892, 16
        %v901 = vpop.permute.xlu0 %900
        %902 = vrot.lane.b32.xlu0 %v893, 16
        %v903 = vpop.permute.xlu0 %902
        %904 = vrot.lane.b32.xlu0 %v894, 16
        %v905 = vpop.permute.xlu0 %904
        %906 = vrot.lane.b32.xlu0 %v895, 16
        %v907 = vpop.permute.xlu0 %906
        %908 = vrot.lane.b32.xlu0 %v896, 16
        %v909 = vpop.permute.xlu0 %908
        %910 = vrot.lane.b32.xlu0 %v897, 16
        %v911 = vpop.permute.xlu0 %910
        %912 = vrot.lane.b32.xlu0 %v898, 16
        %v913 = vpop.permute.xlu0 %912
        %914 = vrot.lane.b32.xlu0 %v899, 16
        %v915 = vpop.permute.xlu0 %914
        %v924 = vunpack.c.l.b16 %v650
        %v925 = vunpack.c.l.b16 %v651
        %v926 = vunpack.c.l.b16 %v652
        %v927 = vunpack.c.l.b16 %v653
        %v928 = vunpack.c.l.b16 %v654
        %v929 = vunpack.c.l.b16 %v655
        %v930 = vunpack.c.l.b16 %v656
        %v931 = vunpack.c.l.b16 %v657
        %v932 = vpack.c.b16 %v924, %v844
        %v933 = vpack.c.b16 %v925, %v845
        %v934 = vpack.c.b16 %v926, %v846
        %v935 = vpack.c.b16 %v927, %v847
        %v936 = vpack.c.b16 %v928, %v848
        %v937 = vpack.c.b16 %v929, %v849
        %v938 = vpack.c.b16 %v930, %v850
        %v939 = vpack.c.b16 %v931, %v851
        %v941 = vshrl.u32 %v932, 16
        %v943 = vshll.u32 %v932, 16
        %v945 = vrot.slane %v943, 1
        %v946 = vor.u32 %v941, %v945
        %v948 = vshrl.u32 %v933, 16
        %v950 = vshll.u32 %v933, 16
        %v952 = vrot.slane %v950, 1
        %v953 = vor.u32 %v948, %v952
        %v955 = vshrl.u32 %v934, 16
        %v957 = vshll.u32 %v934, 16
        %v959 = vrot.slane %v957, 1
        %v960 = vor.u32 %v955, %v959
        %v962 = vshrl.u32 %v935, 16
        %v964 = vshll.u32 %v935, 16
        %v966 = vrot.slane %v964, 1
        %v967 = vor.u32 %v962, %v966
        %v969 = vshrl.u32 %v936, 16
        %v971 = vshll.u32 %v936, 16
        %v973 = vrot.slane %v971, 1
        %v974 = vor.u32 %v969, %v973
        %v976 = vshrl.u32 %v937, 16
        %v978 = vshll.u32 %v937, 16
        %v980 = vrot.slane %v978, 1
        %v981 = vor.u32 %v976, %v980
        %v983 = vshrl.u32 %v938, 16
        %v985 = vshll.u32 %v938, 16
        %v987 = vrot.slane %v985, 1
        %v988 = vor.u32 %v983, %v987
        %v990 = vshrl.u32 %v939, 16
        %v992 = vshll.u32 %v939, 16
        %v994 = vrot.slane %v992, 1
        %v995 = vor.u32 %v990, %v994
        %996 = vrot.lane.b32.xlu0 %v946, 20
        %v997 = vpop.permute.xlu0 %996
        %998 = vrot.lane.b32.xlu0 %v953, 20
        %v999 = vpop.permute.xlu0 %998
        %1000 = vrot.lane.b32.xlu0 %v960, 20
        %v1001 = vpop.permute.xlu0 %1000
        %1002 = vrot.lane.b32.xlu0 %v967, 20
        %v1003 = vpop.permute.xlu0 %1002
        %1004 = vrot.lane.b32.xlu0 %v974, 20
        %v1005 = vpop.permute.xlu0 %1004
        %1006 = vrot.lane.b32.xlu0 %v981, 20
        %v1007 = vpop.permute.xlu0 %1006
        %1008 = vrot.lane.b32.xlu0 %v988, 20
        %v1009 = vpop.permute.xlu0 %1008
        %1010 = vrot.lane.b32.xlu0 %v995, 20
        %v1011 = vpop.permute.xlu0 %1010
        %v1020 = vunpack.c.l.b16 %v659
        %v1021 = vunpack.c.l.b16 %v660
        %v1022 = vunpack.c.l.b16 %v661
        %v1023 = vunpack.c.l.b16 %v662
        %v1024 = vunpack.c.l.b16 %v663
        %v1025 = vunpack.c.l.b16 %v664
        %v1026 = vunpack.c.l.b16 %v665
        %v1027 = vunpack.c.l.b16 %v666
        %v1028 = vpack.c.b16 %v1020, %v1020
        %v1029 = vpack.c.b16 %v1021, %v1021
        %v1030 = vpack.c.b16 %v1022, %v1022
        %v1031 = vpack.c.b16 %v1023, %v1023
        %v1032 = vpack.c.b16 %v1024, %v1024
        %v1033 = vpack.c.b16 %v1025, %v1025
        %v1034 = vpack.c.b16 %v1026, %v1026
        %v1035 = vpack.c.b16 %v1027, %v1027
        %1036 = vrot.lane.b32.xlu0 %v1028, 24
        %v1037 = vpop.permute.xlu0 %1036
        %1038 = vrot.lane.b32.xlu0 %v1029, 24
        %v1039 = vpop.permute.xlu0 %1038
        %1040 = vrot.lane.b32.xlu0 %v1030, 24
        %v1041 = vpop.permute.xlu0 %1040
        %1042 = vrot.lane.b32.xlu0 %v1031, 24
        %v1043 = vpop.permute.xlu0 %1042
        %1044 = vrot.lane.b32.xlu0 %v1032, 24
        %v1045 = vpop.permute.xlu0 %1044
        %1046 = vrot.lane.b32.xlu0 %v1033, 24
        %v1047 = vpop.permute.xlu0 %1046
        %1048 = vrot.lane.b32.xlu0 %v1034, 24
        %v1049 = vpop.permute.xlu0 %1048
        %1050 = vrot.lane.b32.xlu0 %v1035, 24
        %v1051 = vpop.permute.xlu0 %1050
        %v1060 = vunpack.c.l.b16 %v668
        %v1061 = vunpack.c.l.b16 %v669
        %v1062 = vunpack.c.l.b16 %v670
        %v1063 = vunpack.c.l.b16 %v671
        %v1064 = vunpack.c.l.b16 %v672
        %v1065 = vunpack.c.l.b16 %v673
        %v1066 = vunpack.c.l.b16 %v674
        %v1067 = vunpack.c.l.b16 %v675
        %v1068 = vpack.c.b16 %v1060, %v1060
        %v1069 = vpack.c.b16 %v1061, %v1061
        %v1070 = vpack.c.b16 %v1062, %v1062
        %v1071 = vpack.c.b16 %v1063, %v1063
        %v1072 = vpack.c.b16 %v1064, %v1064
        %v1073 = vpack.c.b16 %v1065, %v1065
        %v1074 = vpack.c.b16 %v1066, %v1066
        %v1075 = vpack.c.b16 %v1067, %v1067
        %1076 = vrot.lane.b32.xlu0 %v1068, 28
        %v1077 = vpop.permute.xlu0 %1076
        %1078 = vrot.lane.b32.xlu0 %v1069, 28
        %v1079 = vpop.permute.xlu0 %1078
        %1080 = vrot.lane.b32.xlu0 %v1070, 28
        %v1081 = vpop.permute.xlu0 %1080
        %1082 = vrot.lane.b32.xlu0 %v1071, 28
        %v1083 = vpop.permute.xlu0 %1082
        %1084 = vrot.lane.b32.xlu0 %v1072, 28
        %v1085 = vpop.permute.xlu0 %1084
        %1086 = vrot.lane.b32.xlu0 %v1073, 28
        %v1087 = vpop.permute.xlu0 %1086
        %1088 = vrot.lane.b32.xlu0 %v1074, 28
        %v1089 = vpop.permute.xlu0 %1088
        %1090 = vrot.lane.b32.xlu0 %v1075, 28
        %v1091 = vpop.permute.xlu0 %1090
        %v1100 = vunpack.c.l.b16 %v676
        %v1101 = vunpack.c.l.b16 %v677
        %v1102 = vunpack.c.l.b16 %v678
        %v1103 = vunpack.c.l.b16 %v679
        %v1104 = vunpack.c.l.b16 %v680
        %v1105 = vunpack.c.l.b16 %v681
        %v1106 = vunpack.c.l.b16 %v682
        %v1107 = vunpack.c.l.b16 %v683
        %v1108 = vpack.c.b16 %v1100, %v1020
        %v1109 = vpack.c.b16 %v1101, %v1021
        %v1110 = vpack.c.b16 %v1102, %v1022
        %v1111 = vpack.c.b16 %v1103, %v1023
        %v1112 = vpack.c.b16 %v1104, %v1024
        %v1113 = vpack.c.b16 %v1105, %v1025
        %v1114 = vpack.c.b16 %v1106, %v1026
        %v1115 = vpack.c.b16 %v1107, %v1027
        %v1117 = vshrl.u32 %v1108, 16
        %v1119 = vshll.u32 %v1108, 16
        %v1121 = vrot.slane %v1119, 1
        %v1122 = vor.u32 %v1117, %v1121
        %v1124 = vshrl.u32 %v1109, 16
        %v1126 = vshll.u32 %v1109, 16
        %v1128 = vrot.slane %v1126, 1
        %v1129 = vor.u32 %v1124, %v1128
        %v1131 = vshrl.u32 %v1110, 16
        %v1133 = vshll.u32 %v1110, 16
        %v1135 = vrot.slane %v1133, 1
        %v1136 = vor.u32 %v1131, %v1135
        %v1138 = vshrl.u32 %v1111, 16
        %v1140 = vshll.u32 %v1111, 16
        %v1142 = vrot.slane %v1140, 1
        %v1143 = vor.u32 %v1138, %v1142
        %v1145 = vshrl.u32 %v1112, 16
        %v1147 = vshll.u32 %v1112, 16
        %v1149 = vrot.slane %v1147, 1
        %v1150 = vor.u32 %v1145, %v1149
        %v1152 = vshrl.u32 %v1113, 16
        %v1154 = vshll.u32 %v1113, 16
        %v1156 = vrot.slane %v1154, 1
        %v1157 = vor.u32 %v1152, %v1156
        %v1159 = vshrl.u32 %v1114, 16
        %v1161 = vshll.u32 %v1114, 16
        %v1163 = vrot.slane %v1161, 1
        %v1164 = vor.u32 %v1159, %v1163
        %v1166 = vshrl.u32 %v1115, 16
        %v1168 = vshll.u32 %v1115, 16
        %v1170 = vrot.slane %v1168, 1
        %v1171 = vor.u32 %v1166, %v1170
        %1172 = vrot.lane.b32.xlu0 %v1122, 32
        %v1173 = vpop.permute.xlu0 %1172
        %1174 = vrot.lane.b32.xlu0 %v1129, 32
        %v1175 = vpop.permute.xlu0 %1174
        %1176 = vrot.lane.b32.xlu0 %v1136, 32
        %v1177 = vpop.permute.xlu0 %1176
        %1178 = vrot.lane.b32.xlu0 %v1143, 32
        %v1179 = vpop.permute.xlu0 %1178
        %1180 = vrot.lane.b32.xlu0 %v1150, 32
        %v1181 = vpop.permute.xlu0 %1180
        %1182 = vrot.lane.b32.xlu0 %v1157, 32
        %v1183 = vpop.permute.xlu0 %1182
        %1184 = vrot.lane.b32.xlu0 %v1164, 32
        %v1185 = vpop.permute.xlu0 %1184
        %1186 = vrot.lane.b32.xlu0 %v1171, 32
        %v1187 = vpop.permute.xlu0 %1186
        %vm1188 = vcmask 31744
        %v1191 = vsel %vm1188, %v607, %v709
        %v1194 = vsel %vm1188, %v608, %v711
        %v1197 = vsel %vm1188, %v609, %v713
        %v1200 = vsel %vm1188, %v610, %v715
        %v1203 = vsel %vm1188, %v611, %v717
        %v1206 = vsel %vm1188, %v612, %v719
        %v1209 = vsel %vm1188, %v613, %v721
        %v1212 = vsel %vm1188, %v614, %v723
        %vm1213 = vcmask 64512
        %v1215 = vsel %vm1213, %v1191, %v821
        %v1217 = vsel %vm1213, %v1194, %v823
        %v1219 = vsel %vm1213, %v1197, %v825
        %v1221 = vsel %vm1213, %v1200, %v827
        %v1223 = vsel %vm1213, %v1203, %v829
        %v1225 = vsel %vm1213, %v1206, %v831
        %v1227 = vsel %vm1213, %v1209, %v833
        %v1229 = vsel %vm1213, %v1212, %v835
        %vm1230 = vcmask 97280
        %v1232 = vsel %vm1230, %v1215, %v861
        %v1234 = vsel %vm1230, %v1217, %v863
        %v1236 = vsel %vm1230, %v1219, %v865
        %v1238 = vsel %vm1230, %v1221, %v867
        %v1240 = vsel %vm1230, %v1223, %v869
        %v1242 = vsel %vm1230, %v1225, %v871
        %v1244 = vsel %vm1230, %v1227, %v873
        %v1246 = vsel %vm1230, %v1229, %v875
        %vm1247 = vcmask 130048
        %v1249 = vsel %vm1247, %v1232, %v901
        %v1251 = vsel %vm1247, %v1234, %v903
        %v1253 = vsel %vm1247, %v1236, %v905
        %v1255 = vsel %vm1247, %v1238, %v907
        %v1257 = vsel %vm1247, %v1240, %v909
        %v1259 = vsel %vm1247, %v1242, %v911
        %v1261 = vsel %vm1247, %v1244, %v913
        %v1263 = vsel %vm1247, %v1246, %v915
        %vm1264 = vcmask 162816
        %v1266 = vsel %vm1264, %v1249, %v997
        %v1268 = vsel %vm1264, %v1251, %v999
        %v1270 = vsel %vm1264, %v1253, %v1001
        %v1272 = vsel %vm1264, %v1255, %v1003
        %v1274 = vsel %vm1264, %v1257, %v1005
        %v1276 = vsel %vm1264, %v1259, %v1007
        %v1278 = vsel %vm1264, %v1261, %v1009
        %v1280 = vsel %vm1264, %v1263, %v1011
        %vm1281 = vcmask 195584
        %v1283 = vsel %vm1281, %v1266, %v1037
        %v1285 = vsel %vm1281, %v1268, %v1039
        %v1287 = vsel %vm1281, %v1270, %v1041
        %v1289 = vsel %vm1281, %v1272, %v1043
        %v1291 = vsel %vm1281, %v1274, %v1045
        %v1293 = vsel %vm1281, %v1276, %v1047
        %v1295 = vsel %vm1281, %v1278, %v1049
        %v1297 = vsel %vm1281, %v1280, %v1051
        %vm1298 = vcmask 228352
        %v1300 = vsel %vm1298, %v1283, %v1077
        %v1302 = vsel %vm1298, %v1285, %v1079
        %v1304 = vsel %vm1298, %v1287, %v1081
        %v1306 = vsel %vm1298, %v1289, %v1083
        %v1308 = vsel %vm1298, %v1291, %v1085
        %v1310 = vsel %vm1298, %v1293, %v1087
        %v1312 = vsel %vm1298, %v1295, %v1089
        %v1314 = vsel %vm1298, %v1297, %v1091
        %vm1315 = vcmask 261120
        %v1317 = vsel %vm1315, %v1300, %v1173
        %v1319 = vsel %vm1315, %v1302, %v1175
        %v1321 = vsel %vm1315, %v1304, %v1177
        %v1323 = vsel %vm1315, %v1306, %v1179
        %v1325 = vsel %vm1315, %v1308, %v1181
        %v1327 = vsel %vm1315, %v1310, %v1183
        %v1329 = vsel %vm1315, %v1312, %v1185
        %v1331 = vsel %vm1315, %v1314, %v1187
        %v1332 = vld [vmem:[%s1] sm:$0xf]
        %v1333 = vld [vmem:[%s1 + $0x4] sm:$0xf]
        %v1334 = vld [vmem:[%s1 + $0x8] sm:$0xf]
        %v1335 = vld [vmem:[%s1 + $0xc] sm:$0xf]
        %v1336 = vld [vmem:[%s1 + $0x10] sm:$0x3]
        %v1345 = vunpack.c.l.b16 %v1317
        %v1346 = vunpack.c.l.b16 %v1319
        %v1347 = vunpack.c.l.b16 %v1321
        %v1348 = vunpack.c.l.b16 %v1323
        %v1349 = vunpack.c.l.b16 %v1325
        %v1350 = vunpack.c.l.b16 %v1327
        %v1351 = vunpack.c.l.b16 %v1329
        %v1352 = vunpack.c.l.b16 %v1331
        %v1353 = vpack.c.b16 %v1346, %v1345
        %v1354 = vpack.c.b16 %v1348, %v1347
        %v1355 = vpack.c.b16 %v1350, %v1349
        %v1356 = vpack.c.b16 %v1352, %v1351
        %v1362 = vunpack.c.l.b16 %v1332
        %v1363 = vunpack.c.l.b16 %v1333
        %v1364 = vunpack.c.l.b16 %v1334
        %v1365 = vunpack.c.l.b16 %v1335
        %v1366 = vunpack.c.l.b16 %v1336
        %v1367 = vpack.c.b16 %v1363, %v1362
        %v1368 = vpack.c.b16 %v1365, %v1364
        %v1369 = vpack.c.b16 %v1366, %v1366
        %vm1372 = vcmask 293888
        %v1374 = vsel %vm1372, %v1353, 0
        %v1377 = vsel %vm1372, %v1354, 0
        %v1380 = vsel %vm1372, %v1355, 0
        %v1383 = vsel %vm1372, %v1356, 0
        %vm1385 = vcmask 1041408
        %v1387 = vsel %vm1385, %v1369, 0
        %1389 = vmatprep.subr.bf16.mxu0 0
        %1390 = vmatpush1.bf16.msra.mxu0 0
        %1391 = vmatprep.subr.bf16.mxu0 0
        %1392 = vmatpush1.bf16.msra.mxu0 0
        %1393 = vmatprep.subr.bf16.mxu0 0
        %1394 = vmatpush1.bf16.msra.mxu0 0
        %1395 = vmatprep.subr.bf16.mxu0 0
        %1396 = vmatpush1.bf16.msra.mxu0 0
        %1397 = vmatprep.subr.bf16.mxu0 0
        %1398 = vmatpush1.bf16.msra.mxu0 0
        %1399 = vmatprep.subr.bf16.mxu0 0
        %1400 = vmatpush1.bf16.msra.mxu0 %v1387
        %1401 = vmatprep.subr.bf16.mxu0 0
        %1402 = vmatpush1.bf16.msra.mxu0 %v1368
        %1403 = vmatprep.subr.bf16.mxu0 0
        %1404 = vmatpush1.bf16.msra.mxu0 %v1367
        %1405 = vmatprep.subr.bf16.mxu0 0
        %1406 = vmatpush2.bf16.msra.mxu0 0
        %1407 = vmatprep.subr.bf16.mxu0 0
        %1408 = vmatpush2.bf16.msra.mxu0 0
        %1409 = vmatprep.subr.bf16.mxu0 0
        %1410 = vmatpush2.bf16.msra.mxu0 0
        %1411 = vmatprep.subr.bf16.mxu0 0
        %1412 = vmatpush2.bf16.msra.mxu0 0
        %1413 = vmatprep.subr.bf16.mxu0 0
        %1414 = vmatpush2.bf16.msra.mxu0 0
        %1415 = vmatprep.subr.bf16.mxu0 0
        %1416 = vmatpush2.bf16.msra.mxu0 0
        %1417 = vmatprep.subr.bf16.mxu0 0
        %1418 = vmatpush2.bf16.msra.mxu0 0
        %1419 = vmatprep.subr.bf16.mxu0 0
        %1420 = vmatpush2.bf16.msra.mxu0 0
        %1421 = vmatprep.mubr.bf16.mxu0 0
        %1422 = vmatmul.mubr.bf16.gmra.mxu0 %v1374
        %v1423 = vpop.f32.mrf.mxu0
        %v1424 = vadd.f32 0.0, %v1423
        %v1425 = vpop.f32.mrf.mxu0
        %v1426 = vpop.f32.mrf.mxu0
        %v1427 = vadd.f32 0.0, %v1426
        %v1428 = vpop.f32.mrf.mxu0
        %1429 = vmatprep.mubr.bf16.mxu0 0
        %1430 = vmatmul.mubr.bf16.gmra.mxu0 %v1377
        %v1431 = vpop.f32.mrf.mxu0
        %v1432 = vadd.f32 0.0, %v1431
        %v1433 = vpop.f32.mrf.mxu0
        %v1434 = vpop.f32.mrf.mxu0
        %v1435 = vadd.f32 0.0, %v1434
        %v1436 = vpop.f32.mrf.mxu0
        %1437 = vmatprep.mubr.bf16.mxu0 0
        %1438 = vmatmul.mubr.bf16.gmra.mxu0 %v1380
        %v1439 = vpop.f32.mrf.mxu0
        %v1440 = vadd.f32 0.0, %v1439
        %v1441 = vpop.f32.mrf.mxu0
        %v1442 = vpop.f32.mrf.mxu0
        %v1443 = vadd.f32 0.0, %v1442
        %v1444 = vpop.f32.mrf.mxu0
        %1445 = vmatprep.mubr.bf16.mxu0 0
        %1446 = vmatmul.mubr.bf16.gmra.mxu0 %v1383
        %v1447 = vpop.f32.mrf.mxu0
        %v1448 = vadd.f32 0.0, %v1447
        %v1449 = vpop.f32.mrf.mxu0
        %v1450 = vpop.f32.mrf.mxu0
        %v1451 = vadd.f32 0.0, %v1450
        %v1452 = vpop.f32.mrf.mxu0
        %1453 = vdwg.mxu0
        %v1454 = vpack.c.bf16 %v1424, %v1424
        %v1455 = vpack.c.bf16 %v1427, %v1427
        %v1456 = vpack.c.bf16 %v1432, %v1432
        %v1457 = vpack.c.bf16 %v1435, %v1435
        %v1458 = vpack.c.bf16 %v1440, %v1440
        %v1459 = vpack.c.bf16 %v1443, %v1443
        %v1460 = vpack.c.bf16 %v1448, %v1448
        %v1461 = vpack.c.bf16 %v1451, %v1451
        %1462 = vst [vmem:[%s584] sm:$0xf] %v1454
        %1463 = vst [vmem:[%s584 + $0x4] sm:$0xf] %v1455
        %1464 = vst [vmem:[%s584 + $0x8] sm:$0xf] %v1456
        %1465 = vst [vmem:[%s584 + $0xc] sm:$0xf] %v1457
        %1466 = vst [vmem:[%s584 + $0x10] sm:$0xf] %v1458
        %1467 = vst [vmem:[%s584 + $0x14] sm:$0xf] %v1459
        %1468 = vst [vmem:[%s584 + $0x18] sm:$0xf] %v1460
        %1469 = vst [vmem:[%s584 + $0x1c] sm:$0xf] %v1461
        %v1470 = vadd.f32 %v1424, %v1427
        %v1471 = vadd.f32 %v1470, %v1432
        %v1472 = vadd.f32 %v1471, %v1435
        %v1473 = vadd.f32 %v1472, %v1440
        %v1474 = vadd.f32 %v1473, %v1443
        %v1475 = vadd.f32 %v1474, %v1448
        %v1476 = vadd.f32 %v1475, %v1451
        %v1477 = vrot.slane %v1476, 4
        %v1478 = vadd.f32 %v1476, %v1477
        %v1479 = vrot.slane %v1478, 2
        %v1480 = vadd.f32 %v1478, %v1479
        %v1481 = vrot.slane %v1480, 1
        %v1482 = vadd.f32 %v1480, %v1481
        %1483 = vst [vmem:[%s591] sm:$0x1] %v1482
        %v1484 = vmul.f32 %v1424, %v1424
        %v1485 = vmul.f32 %v1427, %v1427
        %v1486 = vmul.f32 %v1432, %v1432
        %v1487 = vmul.f32 %v1435, %v1435
        %v1488 = vmul.f32 %v1440, %v1440
        %v1489 = vmul.f32 %v1443, %v1443
        %v1490 = vmul.f32 %v1448, %v1448
        %v1491 = vmul.f32 %v1451, %v1451
        %v1492 = vadd.f32 %v1484, %v1485
        %v1493 = vadd.f32 %v1492, %v1486
        %v1494 = vadd.f32 %v1493, %v1487
        %v1495 = vadd.f32 %v1494, %v1488
        %v1496 = vadd.f32 %v1495, %v1489
        %v1497 = vadd.f32 %v1496, %v1490
        %v1498 = vadd.f32 %v1497, %v1491
        %v1499 = vrot.slane %v1498, 4
        %v1500 = vadd.f32 %v1498, %v1499
        %v1501 = vrot.slane %v1500, 2
        %v1502 = vadd.f32 %v1500, %v1501
        %v1503 = vrot.slane %v1502, 1
        %v1504 = vadd.f32 %v1502, %v1503
        %1505 = vst [vmem:[%s591 + $0x1] sm:$0x1] %v1504
        %v1506 = vld [vmem:[%s641] sm:$0xf]
        %v1507 = vld [vmem:[%s641 + $0x8] sm:$0xf]
        %v1508 = vld [vmem:[%s641 + $0x10] sm:$0xf]
        %v1509 = vld [vmem:[%s641 + $0x18] sm:$0xf]
        %v1510 = vld [vmem:[%s641 + $0x20] sm:$0xf]
        %v1511 = vld [vmem:[%s641 + $0x28] sm:$0xf]
        %v1512 = vld [vmem:[%s641 + $0x30] sm:$0xf]
        %v1513 = vld [vmem:[%s641 + $0x38] sm:$0xf]
        %v1514 = vld [vmem:[%s2] sm:$0x3]
        %v1523 = vunpack.c.l.b16 %v1506
        %v1524 = vunpack.c.l.b16 %v1507
        %v1525 = vunpack.c.l.b16 %v1508
        %v1526 = vunpack.c.l.b16 %v1509
        %v1527 = vunpack.c.l.b16 %v1510
        %v1528 = vunpack.c.l.b16 %v1511
        %v1529 = vunpack.c.l.b16 %v1512
        %v1530 = vunpack.c.l.b16 %v1513
        %v1531 = vpack.c.b16 %v1524, %v1523
        %v1532 = vpack.c.b16 %v1526, %v1525
        %v1533 = vpack.c.b16 %v1528, %v1527
        %v1534 = vpack.c.b16 %v1530, %v1529
        %v1536 = vsel %vm1188, %v1531, 0
        %v1539 = vsel %vm1188, %v1532, 0
        %v1542 = vsel %vm1188, %v1533, 0
        %v1545 = vsel %vm1188, %v1534, 0
        %v1548 = vsel %vm1385, %v1514, 0
        %1550 = vmatprep.subr.bf16.mxu0 0
        %1551 = vmatpush1.bf16.msra.mxu0 0
        %1552 = vmatprep.subr.bf16.mxu0 0
        %1553 = vmatpush1.bf16.msra.mxu0 0
        %1554 = vmatprep.subr.bf16.mxu0 0
        %1555 = vmatpush1.bf16.msra.mxu0 0
        %1556 = vmatprep.subr.bf16.mxu0 0
        %1557 = vmatpush1.bf16.msra.mxu0 0
        %1558 = vmatprep.subr.bf16.mxu0 0
        %1559 = vmatpush1.bf16.msra.mxu0 0
        %1560 = vmatprep.subr.bf16.mxu0 0
        %1561 = vmatpush1.bf16.msra.mxu0 0
        %1562 = vmatprep.subr.bf16.mxu0 0
        %1563 = vmatpush1.bf16.msra.mxu0 0
        %1564 = vmatprep.subr.bf16.mxu0 0
        %1565 = vmatpush1.bf16.msra.mxu0 %v1548
        %1566 = vmatprep.subr.bf16.mxu0 0
        %1567 = vmatpush2.bf16.msra.mxu0 0
        %1568 = vmatprep.subr.bf16.mxu0 0
        %1569 = vmatpush2.bf16.msra.mxu0 0
        %1570 = vmatprep.subr.bf16.mxu0 0
        %1571 = vmatpush2.bf16.msra.mxu0 0
        %1572 = vmatprep.subr.bf16.mxu0 0
        %1573 = vmatpush2.bf16.msra.mxu0 0
        %1574 = vmatprep.subr.bf16.mxu0 0
        %1575 = vmatpush2.bf16.msra.mxu0 0
        %1576 = vmatprep.subr.bf16.mxu0 0
        %1577 = vmatpush2.bf16.msra.mxu0 0
        %1578 = vmatprep.subr.bf16.mxu0 0
        %1579 = vmatpush2.bf16.msra.mxu0 0
        %1580 = vmatprep.subr.bf16.mxu0 0
        %1581 = vmatpush2.bf16.msra.mxu0 0
        %1582 = vmatprep.mubr.bf16.mxu0 0
        %1583 = vmatmul.mubr.bf16.gmra.mxu0 %v1536
        %v1584 = vpop.f32.mrf.mxu0
        %v1585 = vadd.f32 0.0, %v1584
        %v1586 = vpop.f32.mrf.mxu0
        %v1587 = vpop.f32.mrf.mxu0
        %v1588 = vadd.f32 0.0, %v1587
        %v1589 = vpop.f32.mrf.mxu0
        %1590 = vmatprep.mubr.bf16.mxu0 0
        %1591 = vmatmul.mubr.bf16.gmra.mxu0 %v1539
        %v1592 = vpop.f32.mrf.mxu0
        %v1593 = vadd.f32 0.0, %v1592
        %v1594 = vpop.f32.mrf.mxu0
        %v1595 = vpop.f32.mrf.mxu0
        %v1596 = vadd.f32 0.0, %v1595
        %v1597 = vpop.f32.mrf.mxu0
        %1598 = vmatprep.mubr.bf16.mxu0 0
        %1599 = vmatmul.mubr.bf16.gmra.mxu0 %v1542
        %v1600 = vpop.f32.mrf.mxu0
        %v1601 = vadd.f32 0.0, %v1600
        %v1602 = vpop.f32.mrf.mxu0
        %v1603 = vpop.f32.mrf.mxu0
        %v1604 = vadd.f32 0.0, %v1603
        %v1605 = vpop.f32.mrf.mxu0
        %1606 = vmatprep.mubr.bf16.mxu0 0
        %1607 = vmatmul.mubr.bf16.gmra.mxu0 %v1545
        %v1608 = vpop.f32.mrf.mxu0
        %v1609 = vadd.f32 0.0, %v1608
        %v1610 = vpop.f32.mrf.mxu0
        %v1611 = vpop.f32.mrf.mxu0
        %v1612 = vadd.f32 0.0, %v1611
        %v1613 = vpop.f32.mrf.mxu0
        %1614 = vdwg.mxu0
        %v1615 = vpack.c.bf16 %v1585, %v1585
        %v1616 = vpack.c.bf16 %v1588, %v1588
        %v1617 = vpack.c.bf16 %v1593, %v1593
        %v1618 = vpack.c.bf16 %v1596, %v1596
        %v1619 = vpack.c.bf16 %v1601, %v1601
        %v1620 = vpack.c.bf16 %v1604, %v1604
        %v1621 = vpack.c.bf16 %v1609, %v1609
        %v1622 = vpack.c.bf16 %v1612, %v1612
        %1623 = vst [vmem:[%s598] sm:$0xf] %v1615
        %1624 = vst [vmem:[%s598 + $0x4] sm:$0xf] %v1616
        %1625 = vst [vmem:[%s598 + $0x8] sm:$0xf] %v1617
        %1626 = vst [vmem:[%s598 + $0xc] sm:$0xf] %v1618
        %1627 = vst [vmem:[%s598 + $0x10] sm:$0xf] %v1619
        %1628 = vst [vmem:[%s598 + $0x14] sm:$0xf] %v1620
        %1629 = vst [vmem:[%s598 + $0x18] sm:$0xf] %v1621
        %1630 = vst [vmem:[%s598 + $0x1c] sm:$0xf] %v1622
        %v1631 = vadd.f32 %v1585, %v1588
        %v1632 = vadd.f32 %v1631, %v1593
        %v1633 = vadd.f32 %v1632, %v1596
        %v1634 = vadd.f32 %v1633, %v1601
        %v1635 = vadd.f32 %v1634, %v1604
        %v1636 = vadd.f32 %v1635, %v1609
        %v1637 = vadd.f32 %v1636, %v1612
        %v1638 = vrot.slane %v1637, 4
        %v1639 = vadd.f32 %v1637, %v1638
        %v1640 = vrot.slane %v1639, 2
        %v1641 = vadd.f32 %v1639, %v1640
        %v1642 = vrot.slane %v1641, 1
        %v1643 = vadd.f32 %v1641, %v1642
        %1644 = vst [vmem:[%s605] sm:$0x1] %v1643
        %v1645 = vmul.f32 %v1585, %v1585
        %v1646 = vmul.f32 %v1588, %v1588
        %v1647 = vmul.f32 %v1593, %v1593
        %v1648 = vmul.f32 %v1596, %v1596
        %v1649 = vmul.f32 %v1601, %v1601
        %v1650 = vmul.f32 %v1604, %v1604
        %v1651 = vmul.f32 %v1609, %v1609
        %v1652 = vmul.f32 %v1612, %v1612
        %v1653 = vadd.f32 %v1645, %v1646
        %v1654 = vadd.f32 %v1653, %v1647
        %v1655 = vadd.f32 %v1654, %v1648
        %v1656 = vadd.f32 %v1655, %v1649
        %v1657 = vadd.f32 %v1656, %v1650
        %v1658 = vadd.f32 %v1657, %v1651
        %v1659 = vadd.f32 %v1658, %v1652
        %v1660 = vrot.slane %v1659, 4
        %v1661 = vadd.f32 %v1659, %v1660
        %v1662 = vrot.slane %v1661, 2
        %v1663 = vadd.f32 %v1661, %v1662
        %v1664 = vrot.slane %v1663, 1
        %v1665 = vadd.f32 %v1663, %v1664
        %1666 = vst [vmem:[%s605 + $0x1] sm:$0x1] %v1665
        %s1667 = sand.u32 %s103, 1
        %s1668 = scalar_lea.sflag [#allocation4], %s1667
        %s1669 = sand.u32 %s103, 1
        %s1670 = smul.addr %s1669, 32
        %s1671 = scalar_lea.vmem [#allocation3], %s1670
        %s1672 = sand.u32 %s27, 1
        %s1673 = scalar_lea.sflag [#allocation6], %s1672
        %s1674 = sand.u32 %s129, 1
        %s1675 = smul.addr %s1674, 2
        %s1676 = scalar_lea.vmem [#allocation5], %s1675
        %s1677 = sand.u32 %s27, 1
        %s1678 = scalar_lea.sflag [#allocation6], %s1677
        %s1679 = sand.u32 %s155, 1
        %s1680 = smul.addr %s1679, 32
        %s1681 = scalar_lea.vmem [#allocation7], %s1680
        %s1682 = sand.u32 %s181, 1
        %s1683 = scalar_lea.sflag [#allocation9], %s1682
        %s1684 = sand.u32 %s181, 1
        %s1685 = smul.addr %s1684, 2
        %s1686 = scalar_lea.vmem [#allocation8], %s1685
        // Predicated region
        $region74: #{tpu_custom_call.1} parent=68 // pred_check
          %p1687 = pneg %p113
        $region75: #{tpu_custom_call.1} parent=68 // pred_check_branch
          %1689 = sbr.rel (%p1687) target = $region77
        $region76: #{tpu_custom_call.1} parent=68 // pred_region
          %s1691 = ssub.s32 512, 512
          %1692 = vsyncadd %s1668, %s1691
          %s1693 = smul.addr %s27, 8
          %s1694 = smul.addr %s1693, 64
          %s1695 = scalar_lea.hbm %s3, %s1694
          %s1696 = sshll.u32 %s1671, 4
          %s1697 = int_to_ptr.vmem [resolvable:$true] %s1696
          %1702 = dma.vmem_to_hbm [thread:$0]  %s1697, 512, %s1695, %s1668, 64, 64, 4
        $region77: #{tpu_custom_call.1} parent=68 // pred_fallthru
          _
        // Predicated region
        $region78: #{tpu_custom_call.1} parent=68 // pred_check
          %p1703 = pneg %p139
        $region79: #{tpu_custom_call.1} parent=68 // pred_check_branch
          %1705 = sbr.rel (%p1703) target = $region81
        $region80: #{tpu_custom_call.1} parent=68 // pred_region
          %s1707 = ssub.s32 32, 32
          %1708 = vsyncadd %s1673, %s1707
          %s1709 = smul.addr %s27, 32
          %s1710 = scalar_lea.hbm %s4, %s1709
          %s1712 = sshll.u32 %s1676, 4
          %s1713 = int_to_ptr.vmem [resolvable:$true] %s1712
          %1715 = dma.vmem_to_hbm [thread:$0]  %s1713, 32, %s1710, %s1673
        $region81: #{tpu_custom_call.1} parent=68 // pred_fallthru
          _
        // Predicated region
        $region82: #{tpu_custom_call.1} parent=68 // pred_check
          %p1716 = pneg %p165
        $region83: #{tpu_custom_call.1} parent=68 // pred_check_branch
          %1718 = sbr.rel (%p1716) target = $region85
        $region84: #{tpu_custom_call.1} parent=68 // pred_region
          %s1720 = ssub.s32 512, 512
          %1721 = vsyncadd %s1678, %s1720
          %s1722 = smul.addr %s27, 8
          %s1723 = smul.addr %s1722, 64
          %s1724 = scalar_lea.hbm %s5, %s1723
          %s1725 = sshll.u32 %s1681, 4
          %s1726 = int_to_ptr.vmem [resolvable:$true] %s1725
          %1731 = dma.vmem_to_hbm [thread:$0]  %s1726, 512, %s1724, %s1678, 64, 64, 4
        $region85: #{tpu_custom_call.1} parent=68 // pred_fallthru
          _
        // Predicated region
        $region86: #{tpu_custom_call.1} parent=68 // pred_check
          %p1732 = pneg %p191
        $region87: #{tpu_custom_call.1} parent=68 // pred_check_branch
          %1734 = sbr.rel (%p1732) target = $region89
        $region88: #{tpu_custom_call.1} parent=68 // pred_region
          %s1736 = ssub.s32 32, 32
          %1737 = vsyncadd %s1683, %s1736
          %s1738 = smul.addr %s27, 32
          %s1739 = scalar_lea.hbm %s6, %s1738
          %s1741 = sshll.u32 %s1686, 4
          %s1742 = int_to_ptr.vmem [resolvable:$true] %s1741
          %1744 = dma.vmem_to_hbm [thread:$0]  %s1742, 32, %s1739, %s1683
        $region89: #{tpu_custom_call.1} parent=68 // pred_fallthru
          _
      $region69: #{tpu_custom_call.1} parent=5 // pred_fallthru
        _
      %p1745 = scmp.le.s32.totalorder 2, %s22
      // Predicated region
      $region90: #{tpu_custom_call.1} parent=5 // pred_check
        %p1746 = pneg %p1745
      $region91: #{tpu_custom_call.1} parent=5 // pred_check_branch
        %1748 = sbr.rel (%p1746) target = $region93
      $region92: #{tpu_custom_call.1} parent=5 // pred_region
        %s1749 = ssub.s32 %s22, 2
        // Predicated region
        $region94: #{tpu_custom_call.1} parent=92 // pred_check
          %p1750 = pneg %p119
        $region95: #{tpu_custom_call.1} parent=92 // pred_check_branch
          %1752 = sbr.rel (%p1750) target = $region97
        $region96: #{tpu_custom_call.1} parent=92 // pred_region
          %s1753 = sand.u32 %s104, 1
          %s1754 = scalar_lea.sflag [#allocation4], %s1753
          %s1755 = sand.u32 %s104, 1
          %s1756 = smul.addr %s1755, 32
          %s1757 = scalar_lea.vmem [#allocation3], %s1756
          %1758 = dma.done %s1754, 512
        $region97: #{tpu_custom_call.1} parent=92 // pred_fallthru
          _
        // Predicated region
        $region98: #{tpu_custom_call.1} parent=92 // pred_check
          %p1759 = pneg %p145
        $region99: #{tpu_custom_call.1} parent=92 // pred_check_branch
          %1761 = sbr.rel (%p1759) target = $region101
        $region100: #{tpu_custom_call.1} parent=92 // pred_region
          %s1762 = sand.u32 %s28, 1
          %s1763 = scalar_lea.sflag [#allocation6], %s1762
          %s1764 = sand.u32 %s130, 1
          %s1765 = smul.addr %s1764, 2
          %s1766 = scalar_lea.vmem [#allocation5], %s1765
          %1767 = dma.done %s1763, 32
        $region101: #{tpu_custom_call.1} parent=92 // pred_fallthru
          _
        // Predicated region
        $region102: #{tpu_custom_call.1} parent=92 // pred_check
          %p1768 = pneg %p171
        $region103: #{tpu_custom_call.1} parent=92 // pred_check_branch
          %1770 = sbr.rel (%p1768) target = $region105
        $region104: #{tpu_custom_call.1} parent=92 // pred_region
          %s1771 = sand.u32 %s28, 1
          %s1772 = scalar_lea.sflag [#allocation6], %s1771
          %s1773 = sand.u32 %s156, 1
          %s1774 = smul.addr %s1773, 32
          %s1775 = scalar_lea.vmem [#allocation7], %s1774
          %1776 = dma.done %s1772, 512
        $region105: #{tpu_custom_call.1} parent=92 // pred_fallthru
          _
        // Predicated region
        $region106: #{tpu_custom_call.1} parent=92 // pred_check
          %p1777 = pneg %p197
        $region107: #{tpu_custom_call.1} parent=92 // pred_check_branch
          %1779 = sbr.rel (%p1777) target = $region109
        $region108: #{tpu_custom_call.1} parent=92 // pred_region
          %s1780 = sand.u32 %s182, 1
          %s1781 = scalar_lea.sflag [#allocation9], %s1780
          %s1782 = sand.u32 %s182, 1
          %s1783 = smul.addr %s1782, 2
          %s1784 = scalar_lea.vmem [#allocation8], %s1783
          %1785 = dma.done %s1781, 32
        $region109: #{tpu_custom_call.1} parent=92 // pred_fallthru
          _
      $region93: #{tpu_custom_call.1} parent=5 // pred_fallthru
        _
    $region6: #{tpu_custom_call.1} parent=1 // loop_footer
      %s26 = sadd.s32 1, %s22
    $region7: #{tpu_custom_call.1} parent=1 // loop_footer_branch
      %21 = sbr.rel target = $region3
    $region8: #{tpu_custom_call.1} parent=1 // loop_exit
      _
    %1786 = vsyncpa [#allocation4], 1
    %s1787 = scalar_lea.sflag [#allocation4], 1
    %1788 = vsyncpa %s1787, 1
    %1789 = vsyncpa [#allocation6], 1
    %s1790 = scalar_lea.sflag [#allocation6], 1
    %1791 = vsyncpa %s1790, 1
    %1792 = vsyncpa [#allocation9], 1
    %s1793 = scalar_lea.sflag [#allocation9], 1
    %1794 = vsyncpa %s1793, 1

</llo_original>
